<compile_context>
chip_gen: v6e
topology: v6e:2x2x1
jax: 0.10.0
libtpu: 0.0.40
codegen_flags: <defaults>
</compile_context>

<pallas_src>
import functools

import jax
import jax.numpy as jnp
import numpy as np
from jax.experimental import pallas as pl
from jax.experimental.pallas import tpu as pltpu

ATTN_DIM = 32
NEG_FILL = -1000000000.0
INV_SQRT_ATTN = ATTN_DIM ** -0.5


def gt_attn_kernel(x_ref, a_ref, mask_ref, wf_ref, bf_ref, out_ref):
    # wf_ref: (8, 64) folded per-class weights, a_ref: (64, TN) -> proj (8, TN) on the MXU.
    proj = (
        jnp.dot(wf_ref[...], a_ref[...], preferred_element_type=jnp.float32)
        + bf_ref[...]
    )  # (8, TN); rows 0..3 = W1^T @ a_proj, row 4 = b1 . a_proj

    # score[k, n] = sum_d x[d, k, n] * proj[d, n] + proj[4, n]   -> (3, TN), lane-dense
    score = (
        x_ref[0] * proj[0:1, :]
        + x_ref[1] * proj[1:2, :]
        + x_ref[2] * proj[2:3, :]
        + x_ref[3] * proj[3:4, :]
        + proj[4:5, :]
    )

    # masked_fill(mask == 0, -1e9) happens BEFORE dividing by sqrt(attn_dim)
    score = jnp.where(mask_ref[...] == 0.0, NEG_FILL, score)
    score = score * INV_SQRT_ATTN

    # softmax over the 3 rows (sublane dim)
    m = jnp.max(score, axis=0, keepdims=True)
    e = jnp.exp(score - m)
    out_ref[...] = (e / jnp.sum(e, axis=0, keepdims=True)).astype(out_ref.dtype)


@functools.partial(jax.jit, static_argnames=("num_class", "tn"))
def gt_attn(x, a, mask, w1, b1, w2, b2, *, num_class, tn=4096):
    B, _, H, W = a.shape
    N = B * H * W
    assert N % 128 == 0, "B*H*W must be a multiple of 128"

    # Clamp the pixel tile to a 128-multiple divisor of N (large by default).
    tn = max(128, (min(tn, N) // 128) * 128)
    while N % tn != 0:
        tn -= 128

    # ---- glue: pixels-on-lanes layouts (plain JAX reshapes/transposes) ----
    x_r = jnp.transpose(x, (1, 3, 2, 0, 4, 5)).reshape(num_class, 4, 3, N)  # (C,4,3,N)
    a_r = jnp.transpose(a, (1, 0, 2, 3)).reshape(64, N)                      # (64,N)
    m_r = jnp.transpose(mask, (1, 4, 0, 2, 3)).reshape(num_class, 3, N)      # (C,3,N)

    # ---- fold Linear(4->32) into the per-class 1x1-conv projection ----
    w1t = jnp.transpose(w1)                         # (4, 32)
    w2m = w2.reshape(num_class, ATTN_DIM, 64)       # (C, 32, 64)
    b2m = b2.reshape(num_class, ATTN_DIM)           # (C, 32)
    M = jnp.einsum("de,ceo->cdo", w1t, w2m)         # (C, 4, 64)  = W1^T @ W2_c
    v = jnp.einsum("de,ce->cd", w1t, b2m)           # (C, 4)      = W1^T @ b2_c
    u = jnp.einsum("e,ceo->co", b1, w2m)            # (C, 64)     = b1^T @ W2_c
    s = jnp.einsum("e,ce->c", b1, b2m)              # (C,)        = b1 . b2_c
    zero_w = jnp.zeros((num_class, 3, 64), M.dtype)
    zero_b = jnp.zeros((num_class, 3), v.dtype)
    wf = jnp.concatenate([M, u[:, None, :], zero_w], axis=1)            # (C, 8, 64)
    bf = jnp.concatenate([v, s[:, None], zero_b], axis=1)[..., None]    # (C, 8, 1)

    # pixel tiles outer (parallel / megacore), classes inner (reuse `a`'s DMA)
    grid = (N // tn, num_class)
    out = pl.pallas_call(
        gt_attn_kernel,
        out_shape=jax.ShapeDtypeStruct((num_class, 3, N), jnp.float32),
        grid_spec=pltpu.PrefetchScalarGridSpec(
            num_scalar_prefetch=0,
            grid=grid,
            in_specs=[
                pl.BlockSpec((None, 4, 3, tn), lambda n, c: (c, 0, 0, n)),  # x
                pl.BlockSpec((64, tn), lambda n, c: (0, n)),                # a (class-invariant)
                pl.BlockSpec((None, 3, tn), lambda n, c: (c, 0, n)),        # mask
                pl.BlockSpec((None, 8, 64), lambda n, c: (c, 0, 0)),        # folded weights
                pl.BlockSpec((None, 8, 1), lambda n, c: (c, 0, 0)),         # folded bias
            ],
            out_specs=pl.BlockSpec((None, 3, tn), lambda n, c: (c, 0, n)),
        ),
        compiler_params=pltpu.CompilerParams(
            dimension_semantics=("parallel", "arbitrary"),
            vmem_limit_bytes=32 * 1024 * 1024,
        ),
    )(x_r, a_r, m_r, wf, bf)

    out = out.reshape(num_class, 3, B, H, W)
    return jnp.transpose(out, (2, 0, 3, 4, 1))  # (B, num_class, H, W, 3)


def gt_attn_reference(x, a, mask, w1, b1, w2, b2, num_class):
    """Pure-JAX reference matching the PyTorch forward exactly (un-folded math)."""
    B, _, H, W = a.shape
    xp = jnp.transpose(x, (0, 1, 4, 5, 2, 3))                      # (B,C,H,W,3,4)
    xp = jnp.einsum("bchwkd,ed->bchwke", xp, w1) + b1              # Linear(4,32)
    ap = jnp.einsum("oi,bihw->bohw", w2.reshape(-1, 64), a)        # 1x1 conv
    ap = ap + b2[None, :, None, None]
    ap = ap.reshape(B, num_class, ATTN_DIM, H, W)
    ap = jnp.transpose(ap, (0, 1, 3, 4, 2))                        # (B,C,H,W,32)
    score = jnp.einsum("bchwke,bchwe->bchwk", xp, ap)              # (B,C,H,W,3)
    score = jnp.where(mask == 0, NEG_FILL, score)
    score = score / (ATTN_DIM ** 0.5)
    return jax.nn.softmax(score, axis=-1)


if __name__ == "__main__":
    # Small deterministic example: B=2, num_class=3, H=W=32  ->  N = 2*32*32 = 2048
    B, C, H, W = 2, 3, 32, 32
    key = jax.random.PRNGKey(0)
    kx, ka, km, kw1, kb1, kw2, kb2 = jax.random.split(key, 7)

    x = jax.random.normal(kx, (B, C, 3, 4, H, W), dtype=jnp.float32)
    a = jax.random.normal(ka, (B, 64, H, W), dtype=jnp.float32)
    mask = jax.random.bernoulli(km, 0.7, (B, C, H, W, 3)).astype(jnp.float32)

    # Deterministic parameter init (shapes from nn.Linear(4,32) / nn.Conv2d(64, 32*C, 1))
    w1 = 0.1 * jax.random.normal(kw1, (ATTN_DIM, 4), dtype=jnp.float32)
    b1 = 0.1 * jax.random.normal(kb1, (ATTN_DIM,), dtype=jnp.float32)
    w2_full = 0.1 * jax.random.normal(kw2, (ATTN_DIM * C, 64, 1, 1), dtype=jnp.float32)
    b2 = 0.1 * jax.random.normal(kb2, (ATTN_DIM * C,), dtype=jnp.float32)
    w2 = w2_full[:, :, 0, 0]  # (32*C, 64) — 1x1 conv kernel as a matrix

    # tn=1024 exercises multiple pixel tiles at this small size; production default is 4096.
    out = gt_attn(x, a, mask, w1, b1, w2, b2, num_class=C, tn=1024)
    out = jax.block_until_ready(out)

    ref = gt_attn_reference(x, a, mask, w1, b1, w2, b2, C)
    np.testing.assert_allclose(np.asarray(out), np.asarray(ref), rtol=1e-5, atol=1e-5)

    assert out.shape == (B, C, H, W, 3)
    print("KERNEL_OK")
</pallas_src>

<mosaic_0001>
module attributes {stable_mosaic.version = 11 : i64} {
  func.func @gt_attn_kernel(%arg0: i32, %arg1: i32, %arg2: memref<1x4x3x1024xf32, #tpu.memory_space<vmem>>, %arg3: memref<64x1024xf32, #tpu.memory_space<vmem>>, %arg4: memref<1x3x1024xf32, #tpu.memory_space<vmem>>, %arg5: memref<1x8x64xf32, #tpu.memory_space<vmem>>, %arg6: memref<1x8x1xf32, #tpu.memory_space<vmem>>, %arg7: memref<1x3x1024xf32, #tpu.memory_space<vmem>>) attributes {dimension_semantics = [#tpu.dimension_semantics<parallel>, #tpu.dimension_semantics<arbitrary>], iteration_bounds = array<i64: 2, 3>, scalar_prefetch = 0 : i64, scratch_operands = 0 : i64, tpu.core_type = #tpu.core_type<tc>, window_params = [{transform_indices = @transform_0, window_bounds = array<i64: 1, 4, 3, 1024>}, {transform_indices = @transform_1, window_bounds = array<i64: 64, 1024>}, {transform_indices = @transform_2, window_bounds = array<i64: 1, 3, 1024>}, {transform_indices = @transform_3, window_bounds = array<i64: 1, 8, 64>}, {transform_indices = @transform_4, window_bounds = array<i64: 1, 8, 1>}, {transform_indices = @transform_5, window_bounds = array<i64: 1, 3, 1024>}]} {
    %c0 = arith.constant 0 : index
    %c0_0 = arith.constant 0 : index
    %c0_1 = arith.constant 0 : index
    %0 = vector.load %arg5[%c0, %c0_0, %c0_1] : memref<1x8x64xf32, #tpu.memory_space<vmem>>, vector<1x8x64xf32>
    %1 = vector.shape_cast %0 : vector<1x8x64xf32> to vector<8x64xf32>
    %c0_2 = arith.constant 0 : index
    %c0_3 = arith.constant 0 : index
    %2 = vector.load %arg3[%c0_2, %c0_3] : memref<64x1024xf32, #tpu.memory_space<vmem>>, vector<64x1024xf32>
    %cst = arith.constant dense<0.000000e+00> : vector<8x1024xf32>
    %3 = tpu.matmul %1, %2, %cst {dimension_numbers = #tpu.dot_dimension_numbers<[1], [0], [0], [1], [0, 0, 1, 1], [], []>} : vector<8x64xf32>, vector<64x1024xf32>, vector<8x1024xf32> -> vector<8x1024xf32>
    %c0_4 = arith.constant 0 : index
    %c0_5 = arith.constant 0 : index
    %c0_6 = arith.constant 0 : index
    %4 = vector.load %arg6[%c0_4, %c0_5, %c0_6] : memref<1x8x1xf32, #tpu.memory_space<vmem>>, vector<1x8x1xf32>
    %5 = vector.shape_cast %4 : vector<1x8x1xf32> to vector<8x1xf32>
    %6 = vector.broadcast %5 : vector<8x1xf32> to vector<8x1024xf32>
    %7 = arith.addf %3, %6 : vector<8x1024xf32>
    %c0_7 = arith.constant 0 : index
    %c0_8 = arith.constant 0 : index
    %c0_9 = arith.constant 0 : index
    %c0_10 = arith.constant 0 : index
    %8 = vector.load %arg2[%c0_7, %c0_8, %c0_9, %c0_10] : memref<1x4x3x1024xf32, #tpu.memory_space<vmem>>, vector<1x1x3x1024xf32>
    %9 = vector.shape_cast %8 : vector<1x1x3x1024xf32> to vector<3x1024xf32>
    %10 = vector.extract_strided_slice %7 {offsets = [0, 0], sizes = [1, 1024], strides = [1, 1]} : vector<8x1024xf32> to vector<1x1024xf32>
    %11 = vector.broadcast %10 : vector<1x1024xf32> to vector<3x1024xf32>
    %12 = arith.mulf %9, %11 : vector<3x1024xf32>
    %c0_11 = arith.constant 0 : index
    %c1 = arith.constant 1 : index
    %c0_12 = arith.constant 0 : index
    %c0_13 = arith.constant 0 : index
    %13 = vector.load %arg2[%c0_11, %c1, %c0_12, %c0_13] : memref<1x4x3x1024xf32, #tpu.memory_space<vmem>>, vector<1x1x3x1024xf32>
    %14 = vector.shape_cast %13 : vector<1x1x3x1024xf32> to vector<3x1024xf32>
    %15 = vector.extract_strided_slice %7 {offsets = [1, 0], sizes = [1, 1024], strides = [1, 1]} : vector<8x1024xf32> to vector<1x1024xf32>
    %16 = vector.broadcast %15 : vector<1x1024xf32> to vector<3x1024xf32>
    %17 = arith.mulf %14, %16 : vector<3x1024xf32>
    %18 = arith.addf %12, %17 : vector<3x1024xf32>
    %c0_14 = arith.constant 0 : index
    %c2 = arith.constant 2 : index
    %c0_15 = arith.constant 0 : index
    %c0_16 = arith.constant 0 : index
    %19 = vector.load %arg2[%c0_14, %c2, %c0_15, %c0_16] : memref<1x4x3x1024xf32, #tpu.memory_space<vmem>>, vector<1x1x3x1024xf32>
    %20 = vector.shape_cast %19 : vector<1x1x3x1024xf32> to vector<3x1024xf32>
    %21 = vector.extract_strided_slice %7 {offsets = [2, 0], sizes = [1, 1024], strides = [1, 1]} : vector<8x1024xf32> to vector<1x1024xf32>
    %22 = vector.broadcast %21 : vector<1x1024xf32> to vector<3x1024xf32>
    %23 = arith.mulf %20, %22 : vector<3x1024xf32>
    %24 = arith.addf %18, %23 : vector<3x1024xf32>
    %c0_17 = arith.constant 0 : index
    %c3 = arith.constant 3 : index
    %c0_18 = arith.constant 0 : index
    %c0_19 = arith.constant 0 : index
    %25 = vector.load %arg2[%c0_17, %c3, %c0_18, %c0_19] : memref<1x4x3x1024xf32, #tpu.memory_space<vmem>>, vector<1x1x3x1024xf32>
    %26 = vector.shape_cast %25 : vector<1x1x3x1024xf32> to vector<3x1024xf32>
    %27 = vector.extract_strided_slice %7 {offsets = [3, 0], sizes = [1, 1024], strides = [1, 1]} : vector<8x1024xf32> to vector<1x1024xf32>
    %28 = vector.broadcast %27 : vector<1x1024xf32> to vector<3x1024xf32>
    %29 = arith.mulf %26, %28 : vector<3x1024xf32>
    %30 = arith.addf %24, %29 : vector<3x1024xf32>
    %31 = vector.extract_strided_slice %7 {offsets = [4, 0], sizes = [1, 1024], strides = [1, 1]} : vector<8x1024xf32> to vector<1x1024xf32>
    %32 = vector.broadcast %31 : vector<1x1024xf32> to vector<3x1024xf32>
    %33 = arith.addf %30, %32 : vector<3x1024xf32>
    %c0_20 = arith.constant 0 : index
    %c0_21 = arith.constant 0 : index
    %c0_22 = arith.constant 0 : index
    %34 = vector.load %arg4[%c0_20, %c0_21, %c0_22] : memref<1x3x1024xf32, #tpu.memory_space<vmem>>, vector<1x3x1024xf32>
    %35 = vector.shape_cast %34 : vector<1x3x1024xf32> to vector<3x1024xf32>
    %cst_23 = arith.constant 0.000000e+00 : f32
    %36 = vector.broadcast %cst_23 : f32 to vector<3x1024xf32>
    %37 = arith.cmpf oeq, %35, %36 : vector<3x1024xf32>
    %cst_24 = arith.constant -1.000000e+09 : f32
    %38 = vector.broadcast %cst_24 : f32 to vector<3x1024xf32>
    %39 = arith.select %37, %38, %33 : vector<3x1024xi1>, vector<3x1024xf32>
    %cst_25 = arith.constant 0.176776692 : f32
    %40 = vector.broadcast %cst_25 : f32 to vector<3x1024xf32>
    %41 = arith.mulf %39, %40 : vector<3x1024xf32>
    %cst_26 = arith.constant dense<0xFF800000> : vector<1024xf32>
    %42 = vector.multi_reduction <maximumf>, %41, %cst_26 [0] : vector<3x1024xf32> to vector<1024xf32>
    %43 = vector.shape_cast %42 : vector<1024xf32> to vector<1x1024xf32>
    %44 = vector.broadcast %43 : vector<1x1024xf32> to vector<3x1024xf32>
    %45 = arith.subf %41, %44 : vector<3x1024xf32>
    %46 = math.exp %45 : vector<3x1024xf32>
    %cst_27 = arith.constant dense<0.000000e+00> : vector<1024xf32>
    %47 = vector.multi_reduction <add>, %46, %cst_27 [0] : vector<3x1024xf32> to vector<1024xf32>
    %48 = vector.shape_cast %47 : vector<1024xf32> to vector<1x1024xf32>
    %49 = vector.broadcast %48 : vector<1x1024xf32> to vector<3x1024xf32>
    %50 = arith.divf %46, %49 : vector<3x1024xf32>
    %c0_28 = arith.constant 0 : index
    %c0_29 = arith.constant 0 : index
    %c0_30 = arith.constant 0 : index
    %51 = vector.load %arg7[%c0_28, %c0_29, %c0_30] : memref<1x3x1024xf32, #tpu.memory_space<vmem>>, vector<1x3x1024xf32>
    %52 = vector.shape_cast %51 : vector<1x3x1024xf32> to vector<3x1024xf32>
    %53 = vector.shape_cast %50 : vector<3x1024xf32> to vector<1x3x1024xf32>
    tpu.vector_store %arg7[%c0_28, %c0_29, %c0_30], %53 {strides = array<i32>} : memref<1x3x1024xf32, #tpu.memory_space<vmem>>, vector<1x3x1024xf32>,
    return
  }
  func.func @transform_0(%arg0: i32, %arg1: i32) -> (i32, i32, i32, i32) {
    %c0_i32 = arith.constant 0 : i32
    %c0_i32_0 = arith.constant 0 : i32
    %c0_i32_1 = arith.constant 0 : i32
    return %arg1, %c0_i32, %c0_i32_0, %arg0 : i32, i32, i32, i32
  }
  func.func @transform_1(%arg0: i32, %arg1: i32) -> (i32, i32) {
    %c0_i32 = arith.constant 0 : i32
    %c0_i32_0 = arith.constant 0 : i32
    return %c0_i32, %arg0 : i32, i32
  }
  func.func @transform_2(%arg0: i32, %arg1: i32) -> (i32, i32, i32) {
    %c0_i32 = arith.constant 0 : i32
    %c0_i32_0 = arith.constant 0 : i32
    return %arg1, %c0_i32, %arg0 : i32, i32, i32
  }
  func.func @transform_3(%arg0: i32, %arg1: i32) -> (i32, i32, i32) {
    %c0_i32 = arith.constant 0 : i32
    %c0_i32_0 = arith.constant 0 : i32
    %c0_i32_1 = arith.constant 0 : i32
    return %arg1, %c0_i32, %c0_i32_0 : i32, i32, i32
  }
  func.func @transform_4(%arg0: i32, %arg1: i32) -> (i32, i32, i32) {
    %c0_i32 = arith.constant 0 : i32
    %c0_i32_0 = arith.constant 0 : i32
    %c0_i32_1 = arith.constant 0 : i32
    return %arg1, %c0_i32, %c0_i32_0 : i32, i32, i32
  }
  func.func @transform_5(%arg0: i32, %arg1: i32) -> (i32, i32, i32) {
    %c0_i32 = arith.constant 0 : i32
    %c0_i32_0 = arith.constant 0 : i32
    return %arg1, %c0_i32, %arg0 : i32, i32, i32
  }
}

</mosaic_0001>

<llo_original>
// kernel: gt_attn.1
$region0: #{gt_attn.1}
  #allocation0 [shape = 'u32[]', space=smem, size = 0x4, offset = 0x4, fixed_abs, tag = 'smem constant byte address 0x4 - core index']
  #allocation1 [shape = 'u32[144,128]{1,0:T(1,128)}', space=vmem, size = 0x12000, scoped, tag = 'internal scratch']
  %s0 = inlined_call_operand.vmem [shape: f32[3,4,3,2048], index: 0, kind: input, shape index: {}]
  %s1 = inlined_call_operand.vmem [shape: f32[64,2048], index: 1, kind: input, shape index: {}]
  %s2 = inlined_call_operand.vmem [shape: f32[3,3,2048], index: 2, kind: input, shape index: {}]
  %s3 = inlined_call_operand.vmem [shape: f32[3,8,64], index: 3, kind: input, shape index: {}]
  %s4 = inlined_call_operand.vmem [shape: f32[3,8,1], index: 4, kind: input, shape index: {}]
  %s5 = inlined_call_operand.vmem [shape: f32[3,3,2048], index: 5, kind: output, shape index: {}]
  %s6 = sld [smem:[#allocation0]]
  $region99: #{gt_attn.1} parent=0
    _
  %s8 = ssub.s32 1, %s6
  %s9 = scalar_select 0, %s8, %s6
  $region1: #{gt_attn.1} parent=0
    #allocation2 [shape = 'u8[131072]{0}', space=vmem, size = 0x20000, scoped, tag = 'input window, operand 0']
    #allocation3 [shape = 'u8[524288]{0}', space=vmem, size = 0x80000, scoped, tag = 'input window, operand 1']
    loop: start=0, step=1, limit=8
    $region2: #{gt_attn.1} parent=1 // loop_pre_header
      _
    $region3: #{gt_attn.1} parent=1 // loop_header
      %s11 = sphi 0, %s15
      %p12 = scmp.ge.s32.totalorder %s11, 8
      %s18 = sphi 0, %s30
      %s19 = sphi 0, %s26
      %s20 = sphi 0, %s18
      %s21 = sphi 0, %s19
      %s22 = sphi 0, %s20
      %s23 = sphi 0, %s21
      %s35 = sphi 0, %s37
      %s38 = sphi 0, %s35
      %s39 = sphi 0, %s38
      %s55 = sphi 0, %s39
      %s61 = sphi 0, %s63
      %s64 = sphi 0, %s61
      %s65 = sphi 0, %s64
      %s81 = sphi 0, %s65
      %s89 = sphi 0, %s91
      %s92 = sphi 0, %s89
      %s93 = sphi 0, %s92
      %s109 = sphi 0, %s93
      %s115 = sphi 0, %s117
      %s118 = sphi 0, %s115
      %s119 = sphi 0, %s118
      %s135 = sphi 0, %s119
      %s141 = sphi 0, %s143
      %s144 = sphi 0, %s141
      %s145 = sphi 0, %s144
      %s161 = sphi 0, %s145
      %s169 = sphi 0, %s171
      %s172 = sphi 0, %s169
      %s173 = sphi 0, %s172
      %s189 = sphi 0, %s173
    $region4: #{gt_attn.1} parent=1 // loop_header_branch
      %14 = sbr.rel (%p12) target = $region8
    $region5: #{gt_attn.1} parent=1 // loop_body
      %s16 = ssub.s32 %s11, 1
      %s17 = ssub.s32 %s11, 2
      %s24 = sadd.s32 1, %s19
      %p25 = scmp.ge.s32.totalorder %s24, 3
      %s26 = scalar_select %p25, 0, %s24
      %s27 = sadd.s32 1, %s18
      %s28 = scalar_select %p25, %s27, %s18
      %p29 = scmp.ge.s32.totalorder %s28, 2
      %s30 = scalar_select %p29, 0, %s28
      %s31 = ssub.s32 %s19, %s26
      %s32 = ssub.s32 %s18, %s30
      %s33 = sor.u32 %s31, %s32
      %p34 = scmp.eq.s32.totalorder %s33, 0
      %s36 = sadd.s32 %s35, 1
      %s37 = scalar_select %p34, %s35, %s36
      %p40 = pneg %p34
      %p41 = scmp.eq.s32.totalorder %s11, 5
      %p42 = por %p40, %p41
      %p43 = scmp.ne.s32.totalorder %s35, %s38
      %p44 = scmp.eq.s32.totalorder %s11, 0
      %p45 = por %p43, %p44
      %p46 = scmp.ne.s32.totalorder %s35, %s38
      %p47 = scmp.eq.s32.totalorder %s16, 5
      %p48 = por %p46, %p47
      %p49 = scmp.ne.s32.totalorder %s38, %s39
      %p50 = scmp.eq.s32.totalorder %s16, 0
      %p51 = por %p49, %p50
      %p52 = scmp.ne.s32.totalorder %s38, %s39
      %p53 = scmp.eq.s32.totalorder %s17, 5
      %p54 = por %p52, %p53
      %p56 = scmp.ne.s32.totalorder %s39, %s55
      %p57 = scmp.eq.s32.totalorder %s17, 0
      %p58 = por %p56, %p57
      %s59 = ssub.s32 %s18, %s30
      %p60 = scmp.eq.s32.totalorder %s59, 0
      %s62 = sadd.s32 %s61, 1
      %s63 = scalar_select %p60, %s61, %s62
      %p66 = pneg %p60
      %p67 = scmp.eq.s32.totalorder %s11, 5
      %p68 = por %p66, %p67
      %p69 = scmp.ne.s32.totalorder %s61, %s64
      %p70 = scmp.eq.s32.totalorder %s11, 0
      %p71 = por %p69, %p70
      %p72 = scmp.ne.s32.totalorder %s61, %s64
      %p73 = scmp.eq.s32.totalorder %s16, 5
      %p74 = por %p72, %p73
      %p75 = scmp.ne.s32.totalorder %s64, %s65
      %p76 = scmp.eq.s32.totalorder %s16, 0
      %p77 = por %p75, %p76
      %p78 = scmp.ne.s32.totalorder %s64, %s65
      %p79 = scmp.eq.s32.totalorder %s17, 5
      %p80 = por %p78, %p79
      %p82 = scmp.ne.s32.totalorder %s65, %s81
      %p83 = scmp.eq.s32.totalorder %s17, 0
      %p84 = por %p82, %p83
      %s85 = ssub.s32 %s19, %s26
      %s86 = ssub.s32 %s18, %s30
      %s87 = sor.u32 %s85, %s86
      %p88 = scmp.eq.s32.totalorder %s87, 0
      %s90 = sadd.s32 %s89, 1
      %s91 = scalar_select %p88, %s89, %s90
      %p94 = pneg %p88
      %p95 = scmp.eq.s32.totalorder %s11, 5
      %p96 = por %p94, %p95
      %p97 = scmp.ne.s32.totalorder %s89, %s92
      %p98 = scmp.eq.s32.totalorder %s11, 0
      %p99 = por %p97, %p98
      %p100 = scmp.ne.s32.totalorder %s89, %s92
      %p101 = scmp.eq.s32.totalorder %s16, 5
      %p102 = por %p100, %p101
      %p103 = scmp.ne.s32.totalorder %s92, %s93
      %p104 = scmp.eq.s32.totalorder %s16, 0
      %p105 = por %p103, %p104
      %p106 = scmp.ne.s32.totalorder %s92, %s93
      %p107 = scmp.eq.s32.totalorder %s17, 5
      %p108 = por %p106, %p107
      %p110 = scmp.ne.s32.totalorder %s93, %s109
      %p111 = scmp.eq.s32.totalorder %s17, 0
      %p112 = por %p110, %p111
      %s113 = ssub.s32 %s19, %s26
      %p114 = scmp.eq.s32.totalorder %s113, 0
      %s116 = sadd.s32 %s115, 1
      %s117 = scalar_select %p114, %s115, %s116
      %p120 = pneg %p114
      %p121 = scmp.eq.s32.totalorder %s11, 5
      %p122 = por %p120, %p121
      %p123 = scmp.ne.s32.totalorder %s115, %s118
      %p124 = scmp.eq.s32.totalorder %s11, 0
      %p125 = por %p123, %p124
      %p126 = scmp.ne.s32.totalorder %s115, %s118
      %p127 = scmp.eq.s32.totalorder %s16, 5
      %p128 = por %p126, %p127
      %p129 = scmp.ne.s32.totalorder %s118, %s119
      %p130 = scmp.eq.s32.totalorder %s16, 0
      %p131 = por %p129, %p130
      %p132 = scmp.ne.s32.totalorder %s118, %s119
      %p133 = scmp.eq.s32.totalorder %s17, 5
      %p134 = por %p132, %p133
      %p136 = scmp.ne.s32.totalorder %s119, %s135
      %p137 = scmp.eq.s32.totalorder %s17, 0
      %p138 = por %p136, %p137
      %s139 = ssub.s32 %s19, %s26
      %p140 = scmp.eq.s32.totalorder %s139, 0
      %s142 = sadd.s32 %s141, 1
      %s143 = scalar_select %p140, %s141, %s142
      %p146 = pneg %p140
      %p147 = scmp.eq.s32.totalorder %s11, 5
      %p148 = por %p146, %p147
      %p149 = scmp.ne.s32.totalorder %s141, %s144
      %p150 = scmp.eq.s32.totalorder %s11, 0
      %p151 = por %p149, %p150
      %p152 = scmp.ne.s32.totalorder %s141, %s144
      %p153 = scmp.eq.s32.totalorder %s16, 5
      %p154 = por %p152, %p153
      %p155 = scmp.ne.s32.totalorder %s144, %s145
      %p156 = scmp.eq.s32.totalorder %s16, 0
      %p157 = por %p155, %p156
      %p158 = scmp.ne.s32.totalorder %s144, %s145
      %p159 = scmp.eq.s32.totalorder %s17, 5
      %p160 = por %p158, %p159
      %p162 = scmp.ne.s32.totalorder %s145, %s161
      %p163 = scmp.eq.s32.totalorder %s17, 0
      %p164 = por %p162, %p163
      %s165 = ssub.s32 %s19, %s26
      %s166 = ssub.s32 %s18, %s30
      %s167 = sor.u32 %s165, %s166
      %p168 = scmp.eq.s32.totalorder %s167, 0
      %s170 = sadd.s32 %s169, 1
      %s171 = scalar_select %p168, %s169, %s170
      %p174 = pneg %p168
      %p175 = scmp.eq.s32.totalorder %s11, 5
      %p176 = por %p174, %p175
      %p177 = scmp.ne.s32.totalorder %s169, %s172
      %p178 = scmp.eq.s32.totalorder %s11, 0
      %p179 = por %p177, %p178
      %p180 = scmp.ne.s32.totalorder %s169, %s172
      %p181 = scmp.eq.s32.totalorder %s16, 5
      %p182 = por %p180, %p181
      %p183 = scmp.ne.s32.totalorder %s172, %s173
      %p184 = scmp.eq.s32.totalorder %s16, 0
      %p185 = por %p183, %p184
      %p186 = scmp.ne.s32.totalorder %s172, %s173
      %p187 = scmp.eq.s32.totalorder %s17, 5
      %p188 = por %p186, %p187
      %p190 = scmp.ne.s32.totalorder %s173, %s189
      %p191 = scmp.eq.s32.totalorder %s17, 0
      %p192 = por %p190, %p191
      %p193 = scmp.le.s32.totalorder 1, %s11
      %p194 = scmp.lt.s32.totalorder %s11, 7
      %p195 = pnand %p193, %p194
      %p196 = pneg %p195
      // Predicated region
      $region9: #{gt_attn.1} parent=5 // pred_check
        _
      $region10: #{gt_attn.1} parent=5 // pred_check_branch
        %198 = sbr.rel (%p195) target = $region12
      $region11: #{gt_attn.1} parent=5 // pred_region
        %s199 = ssub.s32 %s11, 1
      $region12: #{gt_attn.1} parent=5 // pred_fallthru
        _
      %p200 = scmp.lt.s32.totalorder %s11, 6
      // Predicated region
      $region13: #{gt_attn.1} parent=5 // pred_check
        %p201 = pneg %p200
      $region14: #{gt_attn.1} parent=5 // pred_check_branch
        %203 = sbr.rel (%p201) target = $region16
      $region15: #{gt_attn.1} parent=5 // pred_region
        // Predicated region
        $region17: #{gt_attn.1} parent=15 // pred_check
          %p204 = pneg %p45
        $region18: #{gt_attn.1} parent=15 // pred_check_branch
          %206 = sbr.rel (%p204) target = $region20
        $region19: #{gt_attn.1} parent=15 // pred_region
          %s207 = sand.u32 %s35, 1
          %s208 = sand.u32 %s35, 1
          %s209 = smul.addr %s208, 128
          %s210 = scalar_lea.vmem [#allocation2], %s209
          %s211 = smul.u32 8, %s18
          %s212 = smul.addr %s19, 64
          %s213 = sadd.s32 %s211, %s212
          %s214 = smul.addr %s213, 4
          %s215 = scalar_lea.vmem %s0, %s214
          // Predicated region
          $region21: #{gt_attn.1} parent=19 // pred_check
            _
          $region22: #{gt_attn.1} parent=19 // pred_check_branch
            %217 = sbr.rel (0) target = $region24
          $region23: #{gt_attn.1} parent=19 // pred_region
            // Predicated region
            $region25: #{gt_attn.1} parent=23 // pred_check
              _
            $region26: #{gt_attn.1} parent=23 // pred_check_branch
              %219 = sbr.rel (0) target = $region28
            $region27: #{gt_attn.1} parent=23 // pred_region
              loop: start=0, step=1, limit=1
              $region29: #{gt_attn.1} parent=27 // loop_pre_header
                _
              $region30: #{gt_attn.1} parent=27 // loop_header
                %s221 = sphi 0, %s225
                %p222 = scmp.ge.s32.totalorder %s221, 1
                %s226 = sphi %s215, %s215
                %s227 = sphi %s210, %s210
              $region31: #{gt_attn.1} parent=27 // loop_header_branch
                %224 = sbr.rel (%p222) target = $region35
              $region32: #{gt_attn.1} parent=27 // loop_body
                %v228 = vld [vmem:[%s226] sm:$0xff]
                %229 = vst [vmem:[%s227] sm:$0xff] %v228
                %v230 = vld [vmem:[%s226 + $0x8] sm:$0xff]
                %231 = vst [vmem:[%s227 + $0x8] sm:$0xff] %v230
                %v232 = vld [vmem:[%s226 + $0x10] sm:$0xff]
                %233 = vst [vmem:[%s227 + $0x10] sm:$0xff] %v232
                %v234 = vld [vmem:[%s226 + $0x18] sm:$0xff]
                %235 = vst [vmem:[%s227 + $0x18] sm:$0xff] %v234
                %v236 = vld [vmem:[%s226 + $0x40] sm:$0xff]
                %237 = vst [vmem:[%s227 + $0x20] sm:$0xff] %v236
                %v238 = vld [vmem:[%s226 + $0x48] sm:$0xff]
                %239 = vst [vmem:[%s227 + $0x28] sm:$0xff] %v238
                %v240 = vld [vmem:[%s226 + $0x50] sm:$0xff]
                %241 = vst [vmem:[%s227 + $0x30] sm:$0xff] %v240
                %v242 = vld [vmem:[%s226 + $0x58] sm:$0xff]
                %243 = vst [vmem:[%s227 + $0x38] sm:$0xff] %v242
                %v244 = vld [vmem:[%s226 + $0x80] sm:$0xff]
                %245 = vst [vmem:[%s227 + $0x40] sm:$0xff] %v244
                %v246 = vld [vmem:[%s226 + $0x88] sm:$0xff]
                %247 = vst [vmem:[%s227 + $0x48] sm:$0xff] %v246
                %v248 = vld [vmem:[%s226 + $0x90] sm:$0xff]
                %249 = vst [vmem:[%s227 + $0x50] sm:$0xff] %v248
                %v250 = vld [vmem:[%s226 + $0x98] sm:$0xff]
                %251 = vst [vmem:[%s227 + $0x58] sm:$0xff] %v250
                %v252 = vld [vmem:[%s226 + $0xc0] sm:$0xff]
                %253 = vst [vmem:[%s227 + $0x60] sm:$0xff] %v252
                %v254 = vld [vmem:[%s226 + $0xc8] sm:$0xff]
                %255 = vst [vmem:[%s227 + $0x68] sm:$0xff] %v254
                %v256 = vld [vmem:[%s226 + $0xd0] sm:$0xff]
                %257 = vst [vmem:[%s227 + $0x70] sm:$0xff] %v256
                %v258 = vld [vmem:[%s226 + $0xd8] sm:$0xff]
                %259 = vst [vmem:[%s227 + $0x78] sm:$0xff] %v258
              $region33: #{gt_attn.1} parent=27 // loop_footer
                %s225 = sadd.s32 1, %s221
              $region34: #{gt_attn.1} parent=27 // loop_footer_branch
                %220 = sbr.rel target = $region30
              $region35: #{gt_attn.1} parent=27 // loop_exit
                _
            $region28: #{gt_attn.1} parent=23 // pred_fallthru
              _
            // Predicated region
            $region36: #{gt_attn.1} parent=23 // pred_check
              _
            $region37: #{gt_attn.1} parent=23 // pred_check_branch
              %261 = sbr.rel target = $region39
            $region38: #{gt_attn.1} parent=23 // pred_region
              _
            $region39: #{gt_attn.1} parent=23 // pred_fallthru
              _
          $region24: #{gt_attn.1} parent=19 // pred_fallthru
            _
          %262 = vnop
        $region20: #{gt_attn.1} parent=15 // pred_fallthru
          _
        // Predicated region
        $region40: #{gt_attn.1} parent=15 // pred_check
          %p263 = pneg %p71
        $region41: #{gt_attn.1} parent=15 // pred_check_branch
          %265 = sbr.rel (%p263) target = $region43
        $region42: #{gt_attn.1} parent=15 // pred_region
          %s266 = sand.u32 %s61, 1
          %s267 = sand.u32 %s61, 1
          %s268 = smul.addr %s267, 512
          %s269 = scalar_lea.vmem [#allocation3], %s268
          %s270 = smul.u32 8, %s18
          %s271 = smul.addr %s270, 8
          %s272 = scalar_lea.vmem %s1, %s271
          // Predicated region
          $region44: #{gt_attn.1} parent=42 // pred_check
            _
          $region45: #{gt_attn.1} parent=42 // pred_check_branch
            %274 = sbr.rel (0) target = $region47
          $region46: #{gt_attn.1} parent=42 // pred_region
            // Predicated region
            $region48: #{gt_attn.1} parent=46 // pred_check
              _
            $region49: #{gt_attn.1} parent=46 // pred_check_branch
              %276 = sbr.rel (0) target = $region51
            $region50: #{gt_attn.1} parent=46 // pred_region
              loop: start=0, step=1, limit=1
              $region52: #{gt_attn.1} parent=50 // loop_pre_header
                _
              $region53: #{gt_attn.1} parent=50 // loop_header
                %s278 = sphi 0, %s282
                %p279 = scmp.ge.s32.totalorder %s278, 1
                %s283 = sphi %s272, %s272
                %s284 = sphi %s269, %s269
              $region54: #{gt_attn.1} parent=50 // loop_header_branch
                %281 = sbr.rel (%p279) target = $region58
              $region55: #{gt_attn.1} parent=50 // loop_body
                %v285 = vld [vmem:[%s283] sm:$0xff]
                %286 = vst [vmem:[%s284] sm:$0xff] %v285
                %v287 = vld [vmem:[%s283 + $0x8] sm:$0xff]
                %288 = vst [vmem:[%s284 + $0x8] sm:$0xff] %v287
                %v289 = vld [vmem:[%s283 + $0x10] sm:$0xff]
                %290 = vst [vmem:[%s284 + $0x10] sm:$0xff] %v289
                %v291 = vld [vmem:[%s283 + $0x18] sm:$0xff]
                %292 = vst [vmem:[%s284 + $0x18] sm:$0xff] %v291
                %v293 = vld [vmem:[%s283 + $0x20] sm:$0xff]
                %294 = vst [vmem:[%s284 + $0x20] sm:$0xff] %v293
                %v295 = vld [vmem:[%s283 + $0x28] sm:$0xff]
                %296 = vst [vmem:[%s284 + $0x28] sm:$0xff] %v295
                %v297 = vld [vmem:[%s283 + $0x30] sm:$0xff]
                %298 = vst [vmem:[%s284 + $0x30] sm:$0xff] %v297
                %v299 = vld [vmem:[%s283 + $0x38] sm:$0xff]
                %300 = vst [vmem:[%s284 + $0x38] sm:$0xff] %v299
                %v301 = vld [vmem:[%s283 + $0x80] sm:$0xff]
                %302 = vst [vmem:[%s284 + $0x40] sm:$0xff] %v301
                %v303 = vld [vmem:[%s283 + $0x88] sm:$0xff]
                %304 = vst [vmem:[%s284 + $0x48] sm:$0xff] %v303
                %v305 = vld [vmem:[%s283 + $0x90] sm:$0xff]
                %306 = vst [vmem:[%s284 + $0x50] sm:$0xff] %v305
                %v307 = vld [vmem:[%s283 + $0x98] sm:$0xff]
                %308 = vst [vmem:[%s284 + $0x58] sm:$0xff] %v307
                %v309 = vld [vmem:[%s283 + $0xa0] sm:$0xff]
                %310 = vst [vmem:[%s284 + $0x60] sm:$0xff] %v309
                %v311 = vld [vmem:[%s283 + $0xa8] sm:$0xff]
                %312 = vst [vmem:[%s284 + $0x68] sm:$0xff] %v311
                %v313 = vld [vmem:[%s283 + $0xb0] sm:$0xff]
                %314 = vst [vmem:[%s284 + $0x70] sm:$0xff] %v313
                %v315 = vld [vmem:[%s283 + $0xb8] sm:$0xff]
                %316 = vst [vmem:[%s284 + $0x78] sm:$0xff] %v315
                %v317 = vld [vmem:[%s283 + $0x100] sm:$0xff]
                %318 = vst [vmem:[%s284 + $0x80] sm:$0xff] %v317
                %v319 = vld [vmem:[%s283 + $0x108] sm:$0xff]
                %320 = vst [vmem:[%s284 + $0x88] sm:$0xff] %v319
                %v321 = vld [vmem:[%s283 + $0x110] sm:$0xff]
                %322 = vst [vmem:[%s284 + $0x90] sm:$0xff] %v321
                %v323 = vld [vmem:[%s283 + $0x118] sm:$0xff]
                %324 = vst [vmem:[%s284 + $0x98] sm:$0xff] %v323
                %v325 = vld [vmem:[%s283 + $0x120] sm:$0xff]
                %326 = vst [vmem:[%s284 + $0xa0] sm:$0xff] %v325
                %v327 = vld [vmem:[%s283 + $0x128] sm:$0xff]
                %328 = vst [vmem:[%s284 + $0xa8] sm:$0xff] %v327
                %v329 = vld [vmem:[%s283 + $0x130] sm:$0xff]
                %330 = vst [vmem:[%s284 + $0xb0] sm:$0xff] %v329
                %v331 = vld [vmem:[%s283 + $0x138] sm:$0xff]
                %332 = vst [vmem:[%s284 + $0xb8] sm:$0xff] %v331
                %v333 = vld [vmem:[%s283 + $0x180] sm:$0xff]
                %334 = vst [vmem:[%s284 + $0xc0] sm:$0xff] %v333
                %v335 = vld [vmem:[%s283 + $0x188] sm:$0xff]
                %336 = vst [vmem:[%s284 + $0xc8] sm:$0xff] %v335
                %v337 = vld [vmem:[%s283 + $0x190] sm:$0xff]
                %338 = vst [vmem:[%s284 + $0xd0] sm:$0xff] %v337
                %v339 = vld [vmem:[%s283 + $0x198] sm:$0xff]
                %340 = vst [vmem:[%s284 + $0xd8] sm:$0xff] %v339
                %v341 = vld [vmem:[%s283 + $0x1a0] sm:$0xff]
                %342 = vst [vmem:[%s284 + $0xe0] sm:$0xff] %v341
                %v343 = vld [vmem:[%s283 + $0x1a8] sm:$0xff]
                %344 = vst [vmem:[%s284 + $0xe8] sm:$0xff] %v343
                %v345 = vld [vmem:[%s283 + $0x1b0] sm:$0xff]
                %346 = vst [vmem:[%s284 + $0xf0] sm:$0xff] %v345
                %v347 = vld [vmem:[%s283 + $0x1b8] sm:$0xff]
                %348 = vst [vmem:[%s284 + $0xf8] sm:$0xff] %v347
                %v349 = vld [vmem:[%s283 + $0x200] sm:$0xff]
                %350 = vst [vmem:[%s284 + $0x100] sm:$0xff] %v349
                %v351 = vld [vmem:[%s283 + $0x208] sm:$0xff]
                %352 = vst [vmem:[%s284 + $0x108] sm:$0xff] %v351
                %v353 = vld [vmem:[%s283 + $0x210] sm:$0xff]
                %354 = vst [vmem:[%s284 + $0x110] sm:$0xff] %v353
                %v355 = vld [vmem:[%s283 + $0x218] sm:$0xff]
                %356 = vst [vmem:[%s284 + $0x118] sm:$0xff] %v355
                %v357 = vld [vmem:[%s283 + $0x220] sm:$0xff]
                %358 = vst [vmem:[%s284 + $0x120] sm:$0xff] %v357
                %v359 = vld [vmem:[%s283 + $0x228] sm:$0xff]
                %360 = vst [vmem:[%s284 + $0x128] sm:$0xff] %v359
                %v361 = vld [vmem:[%s283 + $0x230] sm:$0xff]
                %362 = vst [vmem:[%s284 + $0x130] sm:$0xff] %v361
                %v363 = vld [vmem:[%s283 + $0x238] sm:$0xff]
                %364 = vst [vmem:[%s284 + $0x138] sm:$0xff] %v363
                %v365 = vld [vmem:[%s283 + $0x280] sm:$0xff]
                %366 = vst [vmem:[%s284 + $0x140] sm:$0xff] %v365
                %v367 = vld [vmem:[%s283 + $0x288] sm:$0xff]
                %368 = vst [vmem:[%s284 + $0x148] sm:$0xff] %v367
                %v369 = vld [vmem:[%s283 + $0x290] sm:$0xff]
                %370 = vst [vmem:[%s284 + $0x150] sm:$0xff] %v369
                %v371 = vld [vmem:[%s283 + $0x298] sm:$0xff]
                %372 = vst [vmem:[%s284 + $0x158] sm:$0xff] %v371
                %v373 = vld [vmem:[%s283 + $0x2a0] sm:$0xff]
                %374 = vst [vmem:[%s284 + $0x160] sm:$0xff] %v373
                %v375 = vld [vmem:[%s283 + $0x2a8] sm:$0xff]
                %376 = vst [vmem:[%s284 + $0x168] sm:$0xff] %v375
                %v377 = vld [vmem:[%s283 + $0x2b0] sm:$0xff]
                %378 = vst [vmem:[%s284 + $0x170] sm:$0xff] %v377
                %v379 = vld [vmem:[%s283 + $0x2b8] sm:$0xff]
                %380 = vst [vmem:[%s284 + $0x178] sm:$0xff] %v379
                %v381 = vld [vmem:[%s283 + $0x300] sm:$0xff]
                %382 = vst [vmem:[%s284 + $0x180] sm:$0xff] %v381
                %v383 = vld [vmem:[%s283 + $0x308] sm:$0xff]
                %384 = vst [vmem:[%s284 + $0x188] sm:$0xff] %v383
                %v385 = vld [vmem:[%s283 + $0x310] sm:$0xff]
                %386 = vst [vmem:[%s284 + $0x190] sm:$0xff] %v385
                %v387 = vld [vmem:[%s283 + $0x318] sm:$0xff]
                %388 = vst [vmem:[%s284 + $0x198] sm:$0xff] %v387
                %v389 = vld [vmem:[%s283 + $0x320] sm:$0xff]
                %390 = vst [vmem:[%s284 + $0x1a0] sm:$0xff] %v389
                %v391 = vld [vmem:[%s283 + $0x328] sm:$0xff]
                %392 = vst [vmem:[%s284 + $0x1a8] sm:$0xff] %v391
                %v393 = vld [vmem:[%s283 + $0x330] sm:$0xff]
                %394 = vst [vmem:[%s284 + $0x1b0] sm:$0xff] %v393
                %v395 = vld [vmem:[%s283 + $0x338] sm:$0xff]
                %396 = vst [vmem:[%s284 + $0x1b8] sm:$0xff] %v395
                %v397 = vld [vmem:[%s283 + $0x380] sm:$0xff]
                %398 = vst [vmem:[%s284 + $0x1c0] sm:$0xff] %v397
                %v399 = vld [vmem:[%s283 + $0x388] sm:$0xff]
                %400 = vst [vmem:[%s284 + $0x1c8] sm:$0xff] %v399
                %v401 = vld [vmem:[%s283 + $0x390] sm:$0xff]
                %402 = vst [vmem:[%s284 + $0x1d0] sm:$0xff] %v401
                %v403 = vld [vmem:[%s283 + $0x398] sm:$0xff]
                %404 = vst [vmem:[%s284 + $0x1d8] sm:$0xff] %v403
                %v405 = vld [vmem:[%s283 + $0x3a0] sm:$0xff]
                %406 = vst [vmem:[%s284 + $0x1e0] sm:$0xff] %v405
                %v407 = vld [vmem:[%s283 + $0x3a8] sm:$0xff]
                %408 = vst [vmem:[%s284 + $0x1e8] sm:$0xff] %v407
                %v409 = vld [vmem:[%s283 + $0x3b0] sm:$0xff]
                %410 = vst [vmem:[%s284 + $0x1f0] sm:$0xff] %v409
                %v411 = vld [vmem:[%s283 + $0x3b8] sm:$0xff]
                %412 = vst [vmem:[%s284 + $0x1f8] sm:$0xff] %v411
              $region56: #{gt_attn.1} parent=50 // loop_footer
                %s282 = sadd.s32 1, %s278
              $region57: #{gt_attn.1} parent=50 // loop_footer_branch
                %277 = sbr.rel target = $region53
              $region58: #{gt_attn.1} parent=50 // loop_exit
                _
            $region51: #{gt_attn.1} parent=46 // pred_fallthru
              _
            // Predicated region
            $region59: #{gt_attn.1} parent=46 // pred_check
              _
            $region60: #{gt_attn.1} parent=46 // pred_check_branch
              %414 = sbr.rel target = $region62
            $region61: #{gt_attn.1} parent=46 // pred_region
              _
            $region62: #{gt_attn.1} parent=46 // pred_fallthru
              _
          $region47: #{gt_attn.1} parent=42 // pred_fallthru
            _
          %415 = vnop
        $region43: #{gt_attn.1} parent=15 // pred_fallthru
          _
        // Predicated region
        $region63: #{gt_attn.1} parent=15 // pred_check
          %p416 = pneg %p99
        $region64: #{gt_attn.1} parent=15 // pred_check_branch
          %418 = sbr.rel (%p416) target = $region66
        $region65: #{gt_attn.1} parent=15 // pred_region
          %s419 = smul.u32 8, %s18
          %p420 = scmp.lt.s32.totalorder %s19, 2
          %s421 = scalar_select %p420, %s19, 2
          %p422 = scmp.lt.s32.totalorder %s419, 15
          %s423 = scalar_select %p422, %s419, 15
          %s424 = smul.addr %s421, 16
          %s425 = sadd.s32 %s423, %s424
          %s426 = smul.addr %s425, 4
          %s427 = scalar_lea.vmem %s2, %s426
          %s428 = smul.u32 8, %s18
        $region66: #{gt_attn.1} parent=15 // pred_fallthru
          _
        // Predicated region
        $region67: #{gt_attn.1} parent=15 // pred_check
          %p429 = pneg %p125
        $region68: #{gt_attn.1} parent=15 // pred_check_branch
          %431 = sbr.rel (%p429) target = $region70
        $region69: #{gt_attn.1} parent=15 // pred_region
          %p432 = scmp.lt.s32.totalorder %s19, 2
          %s433 = scalar_select %p432, %s19, 2
          %s434 = smul.addr %s433, 8
          %s435 = scalar_lea.vmem %s3, %s434
        $region70: #{gt_attn.1} parent=15 // pred_fallthru
          _
        // Predicated region
        $region71: #{gt_attn.1} parent=15 // pred_check
          %p436 = pneg %p151
        $region72: #{gt_attn.1} parent=15 // pred_check_branch
          %438 = sbr.rel (%p436) target = $region74
        $region73: #{gt_attn.1} parent=15 // pred_region
          %p439 = scmp.lt.s32.totalorder %s19, 2
          %s440 = scalar_select %p439, %s19, 2
          %s441 = smul.addr %s440, 8
          %s442 = scalar_lea.vmem %s4, %s441
        $region74: #{gt_attn.1} parent=15 // pred_fallthru
          _
      $region16: #{gt_attn.1} parent=5 // pred_fallthru
        _
      %p443 = scmp.le.s32.totalorder 1, %s11
      %p444 = scmp.lt.s32.totalorder %s11, 7
      %p445 = pnand %p443, %p444
      %p446 = pneg %p445
      // Predicated region
      $region75: #{gt_attn.1} parent=5 // pred_check
        _
      $region76: #{gt_attn.1} parent=5 // pred_check_branch
        %448 = sbr.rel (%p445) target = $region78
      $region77: #{gt_attn.1} parent=5 // pred_region
        %s449 = ssub.s32 %s11, 1
        %s450 = sand.u32 %s38, 1
        %s451 = sand.u32 %s38, 1
        %s452 = smul.addr %s451, 128
        %s453 = scalar_lea.vmem [#allocation2], %s452
        // Predicated region
        $region79: #{gt_attn.1} parent=77 // pred_check
          %p454 = pneg %p51
        $region80: #{gt_attn.1} parent=77 // pred_check_branch
          %456 = sbr.rel (%p454) target = $region82
        $region81: #{gt_attn.1} parent=77 // pred_region
          _
        $region82: #{gt_attn.1} parent=77 // pred_fallthru
          _
        %s457 = sand.u32 %s64, 1
        %s458 = sand.u32 %s64, 1
        %s459 = smul.addr %s458, 512
        %s460 = scalar_lea.vmem [#allocation3], %s459
        // Predicated region
        $region83: #{gt_attn.1} parent=77 // pred_check
          %p461 = pneg %p77
        $region84: #{gt_attn.1} parent=77 // pred_check_branch
          %463 = sbr.rel (%p461) target = $region86
        $region85: #{gt_attn.1} parent=77 // pred_region
          _
        $region86: #{gt_attn.1} parent=77 // pred_fallthru
          _
        %s464 = sand.u32 %s38, 1
        %s465 = sand.u32 %s38, 1
        %s466 = smul.addr %s465, 128
        %s467 = scalar_lea.vmem [#allocation2], %s466
        %p468 = pneg %p51
        %p469 = pneg %p48
        %s470 = sand.u32 %s64, 1
        %s471 = sand.u32 %s64, 1
        %s472 = smul.addr %s471, 512
        %s473 = scalar_lea.vmem [#allocation3], %s472
        %p474 = pneg %p77
        %p475 = pneg %p74
        %s476 = smul.u32 8, %s20
        %p477 = scmp.lt.s32.totalorder %s21, 2
        %s478 = scalar_select %p477, %s21, 2
        %p479 = scmp.lt.s32.totalorder %s476, 15
        %s480 = scalar_select %p479, %s476, 15
        %s481 = smul.addr %s478, 16
        %s482 = sadd.s32 %s480, %s481
        %s483 = smul.addr %s482, 4
        %s484 = scalar_lea.vmem %s2, %s483
        %p485 = pneg %p105
        %p486 = pneg %p102
        %p487 = scmp.lt.s32.totalorder %s21, 2
        %s488 = scalar_select %p487, %s21, 2
        %s489 = smul.addr %s488, 8
        %s490 = scalar_lea.vmem %s3, %s489
        %p491 = pneg %p131
        %p492 = pneg %p128
        %p493 = scmp.lt.s32.totalorder %s21, 2
        %s494 = scalar_select %p493, %s21, 2
        %s495 = smul.addr %s494, 8
        %s496 = scalar_lea.vmem %s4, %s495
        %p497 = pneg %p157
        %p498 = pneg %p154
        %p499 = pneg %p185
        %p500 = pneg %p182
        %s501 = smul.u32 8, %s20
        %p502 = scmp.lt.s32.totalorder %s21, 2
        %s503 = scalar_select %p502, %s21, 2
        %p504 = scmp.lt.s32.totalorder %s501, 15
        %s505 = scalar_select %p504, %s501, 15
        %s506 = smul.addr %s503, 16
        %s507 = sadd.s32 %s505, %s506
        %s508 = smul.addr %s507, 4
        %s509 = scalar_lea.vmem %s5, %s508
        %s510 = smul.u32 8, %s20
        %s511 = smul.u32 8, %s20
        %s512 = smul.u32 8, %s20
        %p513 = scmp.lt.s32.totalorder %s21, 2
        %s514 = scalar_select %p513, %s21, 2
        %p515 = scmp.lt.s32.totalorder %s512, 15
        %s516 = scalar_select %p515, %s512, 15
        %s517 = smul.addr %s514, 16
        %s518 = sadd.s32 %s516, %s517
        %s519 = smul.addr %s518, 4
        %s520 = scalar_lea.vmem %s2, %s519
        %s521 = smul.u32 8, %s20
        %p522 = scmp.lt.s32.totalorder %s21, 2
        %s523 = scalar_select %p522, %s21, 2
        %s524 = smul.addr %s523, 8
        %s525 = scalar_lea.vmem %s3, %s524
        %p526 = scmp.lt.s32.totalorder %s21, 2
        %s527 = scalar_select %p526, %s21, 2
        %s528 = smul.addr %s527, 8
        %s529 = scalar_lea.vmem %s4, %s528
        %s530 = smul.u32 8, %s20
        %p531 = scmp.lt.s32.totalorder %s21, 2
        %s532 = scalar_select %p531, %s21, 2
        %p533 = scmp.lt.s32.totalorder %s530, 15
        %s534 = scalar_select %p533, %s530, 15
        %s535 = smul.addr %s532, 16
        %s536 = sadd.s32 %s534, %s535
        %s537 = smul.addr %s536, 4
        %s538 = scalar_lea.vmem %s5, %s537
        %s539 = smul.u32 8, %s20
        %v540 = vld [vmem:[%s525] sm:$0xff]
        %v541 = vld [vmem:[%s460] sm:$0xff]
        %v542 = vld [vmem:[%s460 + $0x8] sm:$0xff]
        %v543 = vld [vmem:[%s460 + $0x10] sm:$0xff]
        %v544 = vld [vmem:[%s460 + $0x18] sm:$0xff]
        %v545 = vld [vmem:[%s460 + $0x20] sm:$0xff]
        %v546 = vld [vmem:[%s460 + $0x28] sm:$0xff]
        %v547 = vld [vmem:[%s460 + $0x30] sm:$0xff]
        %v548 = vld [vmem:[%s460 + $0x38] sm:$0xff]
        %v549 = vld [vmem:[%s460 + $0x40] sm:$0xff]
        %v550 = vld [vmem:[%s460 + $0x48] sm:$0xff]
        %v551 = vld [vmem:[%s460 + $0x50] sm:$0xff]
        %v552 = vld [vmem:[%s460 + $0x58] sm:$0xff]
        %v553 = vld [vmem:[%s460 + $0x60] sm:$0xff]
        %v554 = vld [vmem:[%s460 + $0x68] sm:$0xff]
        %v555 = vld [vmem:[%s460 + $0x70] sm:$0xff]
        %v556 = vld [vmem:[%s460 + $0x78] sm:$0xff]
        %v557 = vld [vmem:[%s460 + $0x80] sm:$0xff]
        %v558 = vld [vmem:[%s460 + $0x88] sm:$0xff]
        %v559 = vld [vmem:[%s460 + $0x90] sm:$0xff]
        %v560 = vld [vmem:[%s460 + $0x98] sm:$0xff]
        %v561 = vld [vmem:[%s460 + $0xa0] sm:$0xff]
        %v562 = vld [vmem:[%s460 + $0xa8] sm:$0xff]
        %v563 = vld [vmem:[%s460 + $0xb0] sm:$0xff]
        %v564 = vld [vmem:[%s460 + $0xb8] sm:$0xff]
        %v565 = vld [vmem:[%s460 + $0xc0] sm:$0xff]
        %v566 = vld [vmem:[%s460 + $0xc8] sm:$0xff]
        %v567 = vld [vmem:[%s460 + $0xd0] sm:$0xff]
        %v568 = vld [vmem:[%s460 + $0xd8] sm:$0xff]
        %v569 = vld [vmem:[%s460 + $0xe0] sm:$0xff]
        %v570 = vld [vmem:[%s460 + $0xe8] sm:$0xff]
        %v571 = vld [vmem:[%s460 + $0xf0] sm:$0xff]
        %v572 = vld [vmem:[%s460 + $0xf8] sm:$0xff]
        %v573 = vld [vmem:[%s460 + $0x100] sm:$0xff]
        %v574 = vld [vmem:[%s460 + $0x108] sm:$0xff]
        %v575 = vld [vmem:[%s460 + $0x110] sm:$0xff]
        %v576 = vld [vmem:[%s460 + $0x118] sm:$0xff]
        %v577 = vld [vmem:[%s460 + $0x120] sm:$0xff]
        %v578 = vld [vmem:[%s460 + $0x128] sm:$0xff]
        %v579 = vld [vmem:[%s460 + $0x130] sm:$0xff]
        %v580 = vld [vmem:[%s460 + $0x138] sm:$0xff]
        %v581 = vld [vmem:[%s460 + $0x140] sm:$0xff]
        %v582 = vld [vmem:[%s460 + $0x148] sm:$0xff]
        %v583 = vld [vmem:[%s460 + $0x150] sm:$0xff]
        %v584 = vld [vmem:[%s460 + $0x158] sm:$0xff]
        %v585 = vld [vmem:[%s460 + $0x160] sm:$0xff]
        %v586 = vld [vmem:[%s460 + $0x168] sm:$0xff]
        %v587 = vld [vmem:[%s460 + $0x170] sm:$0xff]
        %v588 = vld [vmem:[%s460 + $0x178] sm:$0xff]
        %v589 = vld [vmem:[%s460 + $0x180] sm:$0xff]
        %v590 = vld [vmem:[%s460 + $0x188] sm:$0xff]
        %v591 = vld [vmem:[%s460 + $0x190] sm:$0xff]
        %v592 = vld [vmem:[%s460 + $0x198] sm:$0xff]
        %v593 = vld [vmem:[%s460 + $0x1a0] sm:$0xff]
        %v594 = vld [vmem:[%s460 + $0x1a8] sm:$0xff]
        %v595 = vld [vmem:[%s460 + $0x1b0] sm:$0xff]
        %v596 = vld [vmem:[%s460 + $0x1b8] sm:$0xff]
        %v597 = vld [vmem:[%s460 + $0x1c0] sm:$0xff]
        %v598 = vld [vmem:[%s460 + $0x1c8] sm:$0xff]
        %v599 = vld [vmem:[%s460 + $0x1d0] sm:$0xff]
        %v600 = vld [vmem:[%s460 + $0x1d8] sm:$0xff]
        %v601 = vld [vmem:[%s460 + $0x1e0] sm:$0xff]
        %v602 = vld [vmem:[%s460 + $0x1e8] sm:$0xff]
        %v603 = vld [vmem:[%s460 + $0x1f0] sm:$0xff]
        %v604 = vld [vmem:[%s460 + $0x1f8] sm:$0xff]
        %v605 = vld [vmem:[%s529] sm:$0xff]
        %607 = vset.pattern.permute.xlu0 0
        %608 = vperm.xlu0 %607, %v605
        %v609 = vpop.permute.xlu0 %608
        %vm611 = vcmask 523264
        %v613 = vsel %vm611, %v540, 0
        %615 = vmatprep.subr.mxu0 0.0
        %616 = vmatpush1.msra.mxu0 0.0
        %617 = vmatprep.subr.mxu0 0.0
        %618 = vmatpush1.msra.mxu0 0.0
        %619 = vmatprep.subr.mxu0 0.0
        %620 = vmatpush1.msra.mxu0 0.0
        %621 = vmatprep.subr.mxu0 0.0
        %622 = vmatpush1.msra.mxu0 0.0
        %623 = vmatprep.subr.mxu0 0.0
        %624 = vmatpush1.msra.mxu0 0.0
        %625 = vmatprep.subr.mxu0 0.0
        %626 = vmatpush1.msra.mxu0 0.0
        %627 = vmatprep.subr.mxu0 0.0
        %628 = vmatpush1.msra.mxu0 0.0
        %629 = vmatprep.subr.mxu0 0.0
        %630 = vmatpush1.msra.mxu0 0.0
        %631 = vmatprep.subr.mxu0 %v598
        %632 = vmatpush1.msra.mxu0 %v597
        %633 = vmatprep.subr.mxu0 %v590
        %634 = vmatpush1.msra.mxu0 %v589
        %635 = vmatprep.subr.mxu0 %v582
        %636 = vmatpush1.msra.mxu0 %v581
        %637 = vmatprep.subr.mxu0 %v574
        %638 = vmatpush1.msra.mxu0 %v573
        %639 = vmatprep.subr.mxu0 %v566
        %640 = vmatpush1.msra.mxu0 %v565
        %641 = vmatprep.subr.mxu0 %v558
        %642 = vmatpush1.msra.mxu0 %v557
        %643 = vmatprep.subr.mxu0 %v550
        %644 = vmatpush1.msra.mxu0 %v549
        %645 = vmatprep.subr.mxu0 %v542
        %646 = vmatpush1.msra.mxu0 %v541
        %647 = vmatprep.subr.mxu0 0.0
        %648 = vmatpush2.msra.mxu0 0.0
        %649 = vmatprep.subr.mxu0 0.0
        %650 = vmatpush2.msra.mxu0 0.0
        %651 = vmatprep.subr.mxu0 0.0
        %652 = vmatpush2.msra.mxu0 0.0
        %653 = vmatprep.subr.mxu0 0.0
        %654 = vmatpush2.msra.mxu0 0.0
        %655 = vmatprep.subr.mxu0 0.0
        %656 = vmatpush2.msra.mxu0 0.0
        %657 = vmatprep.subr.mxu0 0.0
        %658 = vmatpush2.msra.mxu0 0.0
        %659 = vmatprep.subr.mxu0 0.0
        %660 = vmatpush2.msra.mxu0 0.0
        %661 = vmatprep.subr.mxu0 0.0
        %662 = vmatpush2.msra.mxu0 0.0
        %663 = vmatprep.subr.mxu0 0.0
        %664 = vmatpush2.msra.mxu0 0.0
        %665 = vmatprep.subr.mxu0 0.0
        %666 = vmatpush2.msra.mxu0 0.0
        %667 = vmatprep.subr.mxu0 0.0
        %668 = vmatpush2.msra.mxu0 0.0
        %669 = vmatprep.subr.mxu0 0.0
        %670 = vmatpush2.msra.mxu0 0.0
        %671 = vmatprep.subr.mxu0 0.0
        %672 = vmatpush2.msra.mxu0 0.0
        %673 = vmatprep.subr.mxu0 0.0
        %674 = vmatpush2.msra.mxu0 0.0
        %675 = vmatprep.subr.mxu0 0.0
        %676 = vmatpush2.msra.mxu0 0.0
        %677 = vmatprep.subr.mxu0 0.0
        %678 = vmatpush2.msra.mxu0 0.0
        %679 = vmatprep.mubr.f32.mxu0 0.0
        %680 = vmatmul.mubr.f32.gmra.mxu0 %v613
        %v681 = vpop.f32.mrf.mxu0
        %v682 = vadd.f32 %v609, %v681
        %v683 = vpop.f32.mrf.mxu0
        %v684 = vadd.f32 %v609, %v683
        %685 = vdwg.mxu0
        %686 = vmatprep.subr.mxu0 0.0
        %687 = vmatpush1.msra.mxu0 0.0
        %688 = vmatprep.subr.mxu0 0.0
        %689 = vmatpush1.msra.mxu0 0.0
        %690 = vmatprep.subr.mxu0 0.0
        %691 = vmatpush1.msra.mxu0 0.0
        %692 = vmatprep.subr.mxu0 0.0
        %693 = vmatpush1.msra.mxu0 0.0
        %694 = vmatprep.subr.mxu0 0.0
        %695 = vmatpush1.msra.mxu0 0.0
        %696 = vmatprep.subr.mxu0 0.0
        %697 = vmatpush1.msra.mxu0 0.0
        %698 = vmatprep.subr.mxu0 0.0
        %699 = vmatpush1.msra.mxu0 0.0
        %700 = vmatprep.subr.mxu0 0.0
        %701 = vmatpush1.msra.mxu0 0.0
        %702 = vmatprep.subr.mxu0 %v600
        %703 = vmatpush1.msra.mxu0 %v599
        %704 = vmatprep.subr.mxu0 %v592
        %705 = vmatpush1.msra.mxu0 %v591
        %706 = vmatprep.subr.mxu0 %v584
        %707 = vmatpush1.msra.mxu0 %v583
        %708 = vmatprep.subr.mxu0 %v576
        %709 = vmatpush1.msra.mxu0 %v575
        %710 = vmatprep.subr.mxu0 %v568
        %711 = vmatpush1.msra.mxu0 %v567
        %712 = vmatprep.subr.mxu0 %v560
        %713 = vmatpush1.msra.mxu0 %v559
        %714 = vmatprep.subr.mxu0 %v552
        %715 = vmatpush1.msra.mxu0 %v551
        %716 = vmatprep.subr.mxu0 %v544
        %717 = vmatpush1.msra.mxu0 %v543
        %718 = vmatprep.subr.mxu0 0.0
        %719 = vmatpush2.msra.mxu0 0.0
        %720 = vmatprep.subr.mxu0 0.0
        %721 = vmatpush2.msra.mxu0 0.0
        %722 = vmatprep.subr.mxu0 0.0
        %723 = vmatpush2.msra.mxu0 0.0
        %724 = vmatprep.subr.mxu0 0.0
        %725 = vmatpush2.msra.mxu0 0.0
        %726 = vmatprep.subr.mxu0 0.0
        %727 = vmatpush2.msra.mxu0 0.0
        %728 = vmatprep.subr.mxu0 0.0
        %729 = vmatpush2.msra.mxu0 0.0
        %730 = vmatprep.subr.mxu0 0.0
        %731 = vmatpush2.msra.mxu0 0.0
        %732 = vmatprep.subr.mxu0 0.0
        %733 = vmatpush2.msra.mxu0 0.0
        %734 = vmatprep.subr.mxu0 0.0
        %735 = vmatpush2.msra.mxu0 0.0
        %736 = vmatprep.subr.mxu0 0.0
        %737 = vmatpush2.msra.mxu0 0.0
        %738 = vmatprep.subr.mxu0 0.0
        %739 = vmatpush2.msra.mxu0 0.0
        %740 = vmatprep.subr.mxu0 0.0
        %741 = vmatpush2.msra.mxu0 0.0
        %742 = vmatprep.subr.mxu0 0.0
        %743 = vmatpush2.msra.mxu0 0.0
        %744 = vmatprep.subr.mxu0 0.0
        %745 = vmatpush2.msra.mxu0 0.0
        %746 = vmatprep.subr.mxu0 0.0
        %747 = vmatpush2.msra.mxu0 0.0
        %748 = vmatprep.subr.mxu0 0.0
        %749 = vmatpush2.msra.mxu0 0.0
        %750 = vmatprep.mubr.f32.mxu0 0.0
        %751 = vmatmul.mubr.f32.gmra.mxu0 %v613
        %v752 = vpop.f32.mrf.mxu0
        %v753 = vadd.f32 %v609, %v752
        %v754 = vpop.f32.mrf.mxu0
        %v755 = vadd.f32 %v609, %v754
        %756 = vdwg.mxu0
        %757 = vmatprep.subr.mxu0 0.0
        %758 = vmatpush1.msra.mxu0 0.0
        %759 = vmatprep.subr.mxu0 0.0
        %760 = vmatpush1.msra.mxu0 0.0
        %761 = vmatprep.subr.mxu0 0.0
        %762 = vmatpush1.msra.mxu0 0.0
        %763 = vmatprep.subr.mxu0 0.0
        %764 = vmatpush1.msra.mxu0 0.0
        %765 = vmatprep.subr.mxu0 0.0
        %766 = vmatpush1.msra.mxu0 0.0
        %767 = vmatprep.subr.mxu0 0.0
        %768 = vmatpush1.msra.mxu0 0.0
        %769 = vmatprep.subr.mxu0 0.0
        %770 = vmatpush1.msra.mxu0 0.0
        %771 = vmatprep.subr.mxu0 0.0
        %772 = vmatpush1.msra.mxu0 0.0
        %773 = vmatprep.subr.mxu0 %v602
        %774 = vmatpush1.msra.mxu0 %v601
        %775 = vmatprep.subr.mxu0 %v594
        %776 = vmatpush1.msra.mxu0 %v593
        %777 = vmatprep.subr.mxu0 %v586
        %778 = vmatpush1.msra.mxu0 %v585
        %779 = vmatprep.subr.mxu0 %v578
        %780 = vmatpush1.msra.mxu0 %v577
        %781 = vmatprep.subr.mxu0 %v570
        %782 = vmatpush1.msra.mxu0 %v569
        %783 = vmatprep.subr.mxu0 %v562
        %784 = vmatpush1.msra.mxu0 %v561
        %785 = vmatprep.subr.mxu0 %v554
        %786 = vmatpush1.msra.mxu0 %v553
        %787 = vmatprep.subr.mxu0 %v546
        %788 = vmatpush1.msra.mxu0 %v545
        %789 = vmatprep.subr.mxu0 0.0
        %790 = vmatpush2.msra.mxu0 0.0
        %791 = vmatprep.subr.mxu0 0.0
        %792 = vmatpush2.msra.mxu0 0.0
        %793 = vmatprep.subr.mxu0 0.0
        %794 = vmatpush2.msra.mxu0 0.0
        %795 = vmatprep.subr.mxu0 0.0
        %796 = vmatpush2.msra.mxu0 0.0
        %797 = vmatprep.subr.mxu0 0.0
        %798 = vmatpush2.msra.mxu0 0.0
        %799 = vmatprep.subr.mxu0 0.0
        %800 = vmatpush2.msra.mxu0 0.0
        %801 = vmatprep.subr.mxu0 0.0
        %802 = vmatpush2.msra.mxu0 0.0
        %803 = vmatprep.subr.mxu0 0.0
        %804 = vmatpush2.msra.mxu0 0.0
        %805 = vmatprep.subr.mxu0 0.0
        %806 = vmatpush2.msra.mxu0 0.0
        %807 = vmatprep.subr.mxu0 0.0
        %808 = vmatpush2.msra.mxu0 0.0
        %809 = vmatprep.subr.mxu0 0.0
        %810 = vmatpush2.msra.mxu0 0.0
        %811 = vmatprep.subr.mxu0 0.0
        %812 = vmatpush2.msra.mxu0 0.0
        %813 = vmatprep.subr.mxu0 0.0
        %814 = vmatpush2.msra.mxu0 0.0
        %815 = vmatprep.subr.mxu0 0.0
        %816 = vmatpush2.msra.mxu0 0.0
        %817 = vmatprep.subr.mxu0 0.0
        %818 = vmatpush2.msra.mxu0 0.0
        %819 = vmatprep.subr.mxu0 0.0
        %820 = vmatpush2.msra.mxu0 0.0
        %821 = vmatprep.mubr.f32.mxu0 0.0
        %822 = vmatmul.mubr.f32.gmra.mxu0 %v613
        %v823 = vpop.f32.mrf.mxu0
        %v824 = vadd.f32 %v609, %v823
        %v825 = vpop.f32.mrf.mxu0
        %v826 = vadd.f32 %v609, %v825
        %827 = vdwg.mxu0
        %828 = vmatprep.subr.mxu0 0.0
        %829 = vmatpush1.msra.mxu0 0.0
        %830 = vmatprep.subr.mxu0 0.0
        %831 = vmatpush1.msra.mxu0 0.0
        %832 = vmatprep.subr.mxu0 0.0
        %833 = vmatpush1.msra.mxu0 0.0
        %834 = vmatprep.subr.mxu0 0.0
        %835 = vmatpush1.msra.mxu0 0.0
        %836 = vmatprep.subr.mxu0 0.0
        %837 = vmatpush1.msra.mxu0 0.0
        %838 = vmatprep.subr.mxu0 0.0
        %839 = vmatpush1.msra.mxu0 0.0
        %840 = vmatprep.subr.mxu0 0.0
        %841 = vmatpush1.msra.mxu0 0.0
        %842 = vmatprep.subr.mxu0 0.0
        %843 = vmatpush1.msra.mxu0 0.0
        %844 = vmatprep.subr.mxu0 %v604
        %845 = vmatpush1.msra.mxu0 %v603
        %846 = vmatprep.subr.mxu0 %v596
        %847 = vmatpush1.msra.mxu0 %v595
        %848 = vmatprep.subr.mxu0 %v588
        %849 = vmatpush1.msra.mxu0 %v587
        %850 = vmatprep.subr.mxu0 %v580
        %851 = vmatpush1.msra.mxu0 %v579
        %852 = vmatprep.subr.mxu0 %v572
        %853 = vmatpush1.msra.mxu0 %v571
        %854 = vmatprep.subr.mxu0 %v564
        %855 = vmatpush1.msra.mxu0 %v563
        %856 = vmatprep.subr.mxu0 %v556
        %857 = vmatpush1.msra.mxu0 %v555
        %858 = vmatprep.subr.mxu0 %v548
        %859 = vmatpush1.msra.mxu0 %v547
        %860 = vmatprep.subr.mxu0 0.0
        %861 = vmatpush2.msra.mxu0 0.0
        %862 = vmatprep.subr.mxu0 0.0
        %863 = vmatpush2.msra.mxu0 0.0
        %864 = vmatprep.subr.mxu0 0.0
        %865 = vmatpush2.msra.mxu0 0.0
        %866 = vmatprep.subr.mxu0 0.0
        %867 = vmatpush2.msra.mxu0 0.0
        %868 = vmatprep.subr.mxu0 0.0
        %869 = vmatpush2.msra.mxu0 0.0
        %870 = vmatprep.subr.mxu0 0.0
        %871 = vmatpush2.msra.mxu0 0.0
        %872 = vmatprep.subr.mxu0 0.0
        %873 = vmatpush2.msra.mxu0 0.0
        %874 = vmatprep.subr.mxu0 0.0
        %875 = vmatpush2.msra.mxu0 0.0
        %876 = vmatprep.subr.mxu0 0.0
        %877 = vmatpush2.msra.mxu0 0.0
        %878 = vmatprep.subr.mxu0 0.0
        %879 = vmatpush2.msra.mxu0 0.0
        %880 = vmatprep.subr.mxu0 0.0
        %881 = vmatpush2.msra.mxu0 0.0
        %882 = vmatprep.subr.mxu0 0.0
        %883 = vmatpush2.msra.mxu0 0.0
        %884 = vmatprep.subr.mxu0 0.0
        %885 = vmatpush2.msra.mxu0 0.0
        %886 = vmatprep.subr.mxu0 0.0
        %887 = vmatpush2.msra.mxu0 0.0
        %888 = vmatprep.subr.mxu0 0.0
        %889 = vmatpush2.msra.mxu0 0.0
        %890 = vmatprep.subr.mxu0 0.0
        %891 = vmatpush2.msra.mxu0 0.0
        %892 = vmatprep.mubr.f32.mxu0 0.0
        %893 = vmatmul.mubr.f32.gmra.mxu0 %v613
        %v894 = vpop.f32.mrf.mxu0
        %v895 = vadd.f32 %v609, %v894
        %v896 = vpop.f32.mrf.mxu0
        %v897 = vadd.f32 %v609, %v896
        %898 = vdwg.mxu0
        %v899 = vld [vmem:[%s453] sm:$0x77]
        %v900 = vld [vmem:[%s453 + $0x8] sm:$0x77]
        %v901 = vld [vmem:[%s453 + $0x10] sm:$0x77]
        %v902 = vld [vmem:[%s453 + $0x18] sm:$0x77]
        %v903 = vlaneseq
        %v904 = vshrl.u32 %v903, 7
        %v905 = vsub.s32 0, %v904
        %v906 = vrot.slane %v682, %v905
        %v907 = vlaneseq
        %v908 = vshrl.u32 %v907, 7
        %v909 = vsub.s32 0, %v908
        %v910 = vrot.slane %v684, %v909
        %v911 = vlaneseq
        %v912 = vshrl.u32 %v911, 7
        %v913 = vsub.s32 0, %v912
        %v914 = vrot.slane %v753, %v913
        %v915 = vlaneseq
        %v916 = vshrl.u32 %v915, 7
        %v917 = vsub.s32 0, %v916
        %v918 = vrot.slane %v755, %v917
        %v919 = vlaneseq
        %v920 = vshrl.u32 %v919, 7
        %v921 = vsub.s32 0, %v920
        %v922 = vrot.slane %v824, %v921
        %v923 = vlaneseq
        %v924 = vshrl.u32 %v923, 7
        %v925 = vsub.s32 0, %v924
        %v926 = vrot.slane %v826, %v925
        %v927 = vlaneseq
        %v928 = vshrl.u32 %v927, 7
        %v929 = vsub.s32 0, %v928
        %v930 = vrot.slane %v895, %v929
        %v931 = vlaneseq
        %v932 = vshrl.u32 %v931, 7
        %v933 = vsub.s32 0, %v932
        %v934 = vrot.slane %v897, %v933
        %v943 = vcombine.low %v906, %v910
        %v944 = vcombine.low %v914, %v918
        %v945 = vcombine.low %v922, %v926
        %v946 = vcombine.low %v930, %v934
        %v951 = vmul.f32 %v899, %v943
        %v952 = vmul.f32 %v900, %v944
        %v953 = vmul.f32 %v901, %v945
        %v954 = vmul.f32 %v902, %v946
        %s955 = scalar_lea.vmem %s453, 32 [#allocation2]
        %v956 = vld [vmem:[%s955] sm:$0x77]
        %v957 = vld [vmem:[%s955 + $0x8] sm:$0x77]
        %v958 = vld [vmem:[%s955 + $0x10] sm:$0x77]
        %v959 = vld [vmem:[%s955 + $0x18] sm:$0x77]
        %v960 = vlaneseq
        %v961 = vshrl.u32 %v960, 7
        %v962 = vsub.s32 1, %v961
        %v963 = vrot.slane %v682, %v962
        %v964 = vlaneseq
        %v965 = vshrl.u32 %v964, 7
        %v966 = vsub.s32 1, %v965
        %v967 = vrot.slane %v684, %v966
        %v968 = vlaneseq
        %v969 = vshrl.u32 %v968, 7
        %v970 = vsub.s32 1, %v969
        %v971 = vrot.slane %v753, %v970
        %v972 = vlaneseq
        %v973 = vshrl.u32 %v972, 7
        %v974 = vsub.s32 1, %v973
        %v975 = vrot.slane %v755, %v974
        %v976 = vlaneseq
        %v977 = vshrl.u32 %v976, 7
        %v978 = vsub.s32 1, %v977
        %v979 = vrot.slane %v824, %v978
        %v980 = vlaneseq
        %v981 = vshrl.u32 %v980, 7
        %v982 = vsub.s32 1, %v981
        %v983 = vrot.slane %v826, %v982
        %v984 = vlaneseq
        %v985 = vshrl.u32 %v984, 7
        %v986 = vsub.s32 1, %v985
        %v987 = vrot.slane %v895, %v986
        %v988 = vlaneseq
        %v989 = vshrl.u32 %v988, 7
        %v990 = vsub.s32 1, %v989
        %v991 = vrot.slane %v897, %v990
        %v1000 = vcombine.low %v963, %v967
        %v1001 = vcombine.low %v971, %v975
        %v1002 = vcombine.low %v979, %v983
        %v1003 = vcombine.low %v987, %v991
        %v1008 = vmul.f32 %v956, %v1000
        %v1009 = vmul.f32 %v957, %v1001
        %v1010 = vmul.f32 %v958, %v1002
        %v1011 = vmul.f32 %v959, %v1003
        %v1012 = vadd.f32 %v951, %v1008
        %v1013 = vadd.f32 %v952, %v1009
        %v1014 = vadd.f32 %v953, %v1010
        %v1015 = vadd.f32 %v954, %v1011
        %s1016 = scalar_lea.vmem %s453, 64 [#allocation2]
        %v1017 = vld [vmem:[%s1016] sm:$0x77]
        %v1018 = vld [vmem:[%s1016 + $0x8] sm:$0x77]
        %v1019 = vld [vmem:[%s1016 + $0x10] sm:$0x77]
        %v1020 = vld [vmem:[%s1016 + $0x18] sm:$0x77]
        %v1021 = vlaneseq
        %v1022 = vshrl.u32 %v1021, 7
        %v1023 = vsub.s32 2, %v1022
        %v1024 = vrot.slane %v682, %v1023
        %v1025 = vlaneseq
        %v1026 = vshrl.u32 %v1025, 7
        %v1027 = vsub.s32 2, %v1026
        %v1028 = vrot.slane %v684, %v1027
        %v1029 = vlaneseq
        %v1030 = vshrl.u32 %v1029, 7
        %v1031 = vsub.s32 2, %v1030
        %v1032 = vrot.slane %v753, %v1031
        %v1033 = vlaneseq
        %v1034 = vshrl.u32 %v1033, 7
        %v1035 = vsub.s32 2, %v1034
        %v1036 = vrot.slane %v755, %v1035
        %v1037 = vlaneseq
        %v1038 = vshrl.u32 %v1037, 7
        %v1039 = vsub.s32 2, %v1038
        %v1040 = vrot.slane %v824, %v1039
        %v1041 = vlaneseq
        %v1042 = vshrl.u32 %v1041, 7
        %v1043 = vsub.s32 2, %v1042
        %v1044 = vrot.slane %v826, %v1043
        %v1045 = vlaneseq
        %v1046 = vshrl.u32 %v1045, 7
        %v1047 = vsub.s32 2, %v1046
        %v1048 = vrot.slane %v895, %v1047
        %v1049 = vlaneseq
        %v1050 = vshrl.u32 %v1049, 7
        %v1051 = vsub.s32 2, %v1050
        %v1052 = vrot.slane %v897, %v1051
        %v1061 = vcombine.low %v1024, %v1028
        %v1062 = vcombine.low %v1032, %v1036
        %v1063 = vcombine.low %v1040, %v1044
        %v1064 = vcombine.low %v1048, %v1052
        %v1069 = vmul.f32 %v1017, %v1061
        %v1070 = vmul.f32 %v1018, %v1062
        %v1071 = vmul.f32 %v1019, %v1063
        %v1072 = vmul.f32 %v1020, %v1064
        %v1073 = vadd.f32 %v1012, %v1069
        %v1074 = vadd.f32 %v1013, %v1070
        %v1075 = vadd.f32 %v1014, %v1071
        %v1076 = vadd.f32 %v1015, %v1072
        %s1077 = scalar_lea.vmem %s453, 96 [#allocation2]
        %v1078 = vld [vmem:[%s1077] sm:$0x77]
        %v1079 = vld [vmem:[%s1077 + $0x8] sm:$0x77]
        %v1080 = vld [vmem:[%s1077 + $0x10] sm:$0x77]
        %v1081 = vld [vmem:[%s1077 + $0x18] sm:$0x77]
        %v1082 = vlaneseq
        %v1083 = vshrl.u32 %v1082, 7
        %v1084 = vsub.s32 3, %v1083
        %v1085 = vrot.slane %v682, %v1084
        %v1086 = vlaneseq
        %v1087 = vshrl.u32 %v1086, 7
        %v1088 = vsub.s32 3, %v1087
        %v1089 = vrot.slane %v684, %v1088
        %v1090 = vlaneseq
        %v1091 = vshrl.u32 %v1090, 7
        %v1092 = vsub.s32 3, %v1091
        %v1093 = vrot.slane %v753, %v1092
        %v1094 = vlaneseq
        %v1095 = vshrl.u32 %v1094, 7
        %v1096 = vsub.s32 3, %v1095
        %v1097 = vrot.slane %v755, %v1096
        %v1098 = vlaneseq
        %v1099 = vshrl.u32 %v1098, 7
        %v1100 = vsub.s32 3, %v1099
        %v1101 = vrot.slane %v824, %v1100
        %v1102 = vlaneseq
        %v1103 = vshrl.u32 %v1102, 7
        %v1104 = vsub.s32 3, %v1103
        %v1105 = vrot.slane %v826, %v1104
        %v1106 = vlaneseq
        %v1107 = vshrl.u32 %v1106, 7
        %v1108 = vsub.s32 3, %v1107
        %v1109 = vrot.slane %v895, %v1108
        %v1110 = vlaneseq
        %v1111 = vshrl.u32 %v1110, 7
        %v1112 = vsub.s32 3, %v1111
        %v1113 = vrot.slane %v897, %v1112
        %v1122 = vcombine.low %v1085, %v1089
        %v1123 = vcombine.low %v1093, %v1097
        %v1124 = vcombine.low %v1101, %v1105
        %v1125 = vcombine.low %v1109, %v1113
        %v1130 = vmul.f32 %v1078, %v1122
        %v1131 = vmul.f32 %v1079, %v1123
        %v1132 = vmul.f32 %v1080, %v1124
        %v1133 = vmul.f32 %v1081, %v1125
        %v1134 = vadd.f32 %v1073, %v1130
        %v1135 = vadd.f32 %v1074, %v1131
        %v1136 = vadd.f32 %v1075, %v1132
        %v1137 = vadd.f32 %v1076, %v1133
        %v1138 = vlaneseq
        %v1139 = vshrl.u32 %v1138, 7
        %v1140 = vsub.s32 4, %v1139
        %v1141 = vrot.slane %v682, %v1140
        %v1142 = vlaneseq
        %v1143 = vshrl.u32 %v1142, 7
        %v1144 = vsub.s32 4, %v1143
        %v1145 = vrot.slane %v684, %v1144
        %v1146 = vlaneseq
        %v1147 = vshrl.u32 %v1146, 7
        %v1148 = vsub.s32 4, %v1147
        %v1149 = vrot.slane %v753, %v1148
        %v1150 = vlaneseq
        %v1151 = vshrl.u32 %v1150, 7
        %v1152 = vsub.s32 4, %v1151
        %v1153 = vrot.slane %v755, %v1152
        %v1154 = vlaneseq
        %v1155 = vshrl.u32 %v1154, 7
        %v1156 = vsub.s32 4, %v1155
        %v1157 = vrot.slane %v824, %v1156
        %v1158 = vlaneseq
        %v1159 = vshrl.u32 %v1158, 7
        %v1160 = vsub.s32 4, %v1159
        %v1161 = vrot.slane %v826, %v1160
        %v1162 = vlaneseq
        %v1163 = vshrl.u32 %v1162, 7
        %v1164 = vsub.s32 4, %v1163
        %v1165 = vrot.slane %v895, %v1164
        %v1166 = vlaneseq
        %v1167 = vshrl.u32 %v1166, 7
        %v1168 = vsub.s32 4, %v1167
        %v1169 = vrot.slane %v897, %v1168
        %v1178 = vcombine.low %v1141, %v1145
        %v1179 = vcombine.low %v1149, %v1153
        %v1180 = vcombine.low %v1157, %v1161
        %v1181 = vcombine.low %v1165, %v1169
        %v1186 = vadd.f32 %v1134, %v1178
        %v1187 = vadd.f32 %v1135, %v1179
        %v1188 = vadd.f32 %v1136, %v1180
        %v1189 = vadd.f32 %v1137, %v1181
        %v1190 = vld [vmem:[%s520] sm:$0x77]
        %v1191 = vld [vmem:[%s520 + $0x8] sm:$0x77]
        %v1192 = vld [vmem:[%s520 + $0x10] sm:$0x77]
        %v1193 = vld [vmem:[%s520 + $0x18] sm:$0x77]
        %vm1194 = vcmp.eq.f32.partialorder %v1190, 0.0
        %vm1195 = vcmp.eq.f32.partialorder %v1191, 0.0
        %vm1196 = vcmp.eq.f32.partialorder %v1192, 0.0
        %vm1197 = vcmp.eq.f32.partialorder %v1193, 0.0
        %v1198 = vsel %vm1194, -1e+09, %v1186
        %v1199 = vsel %vm1195, -1e+09, %v1187
        %v1200 = vsel %vm1196, -1e+09, %v1188
        %v1201 = vsel %vm1197, -1e+09, %v1189
        %v1202 = vmul.f32 %v1198, 0.17677669
        %v1203 = vmul.f32 %v1199, 0.17677669
        %v1204 = vmul.f32 %v1200, 0.17677669
        %v1205 = vmul.f32 %v1201, 0.17677669
        %v1210 = vcombine.high %v1202, %v1202
        %v1211 = vcombine.high %v1203, %v1203
        %v1212 = vcombine.high %v1204, %v1204
        %v1213 = vcombine.high %v1205, %v1205
        %vm1218 = vcmask 1042432
        %v1219 = vsel %vm1218, %v1202, -inf
        %v1220 = vrot.slane %v1219, 4
        %v1221 = vmax.f32 %v1219, %v1220
        %v1222 = vrot.slane %v1221, 2
        %v1223 = vmax.f32 %v1221, %v1222
        %v1224 = vrot.slane %v1223, 1
        %v1225 = vmax.f32 %v1223, %v1224
        %v1226 = vsel %vm1218, %v1210, -inf
        %v1227 = vrot.slane %v1226, 4
        %v1228 = vmax.f32 %v1226, %v1227
        %v1229 = vrot.slane %v1228, 2
        %v1230 = vmax.f32 %v1228, %v1229
        %v1231 = vrot.slane %v1230, 1
        %v1232 = vmax.f32 %v1230, %v1231
        %v1233 = vsel %vm1218, %v1203, -inf
        %v1234 = vrot.slane %v1233, 4
        %v1235 = vmax.f32 %v1233, %v1234
        %v1236 = vrot.slane %v1235, 2
        %v1237 = vmax.f32 %v1235, %v1236
        %v1238 = vrot.slane %v1237, 1
        %v1239 = vmax.f32 %v1237, %v1238
        %v1240 = vsel %vm1218, %v1211, -inf
        %v1241 = vrot.slane %v1240, 4
        %v1242 = vmax.f32 %v1240, %v1241
        %v1243 = vrot.slane %v1242, 2
        %v1244 = vmax.f32 %v1242, %v1243
        %v1245 = vrot.slane %v1244, 1
        %v1246 = vmax.f32 %v1244, %v1245
        %v1247 = vsel %vm1218, %v1204, -inf
        %v1248 = vrot.slane %v1247, 4
        %v1249 = vmax.f32 %v1247, %v1248
        %v1250 = vrot.slane %v1249, 2
        %v1251 = vmax.f32 %v1249, %v1250
        %v1252 = vrot.slane %v1251, 1
        %v1253 = vmax.f32 %v1251, %v1252
        %v1254 = vsel %vm1218, %v1212, -inf
        %v1255 = vrot.slane %v1254, 4
        %v1256 = vmax.f32 %v1254, %v1255
        %v1257 = vrot.slane %v1256, 2
        %v1258 = vmax.f32 %v1256, %v1257
        %v1259 = vrot.slane %v1258, 1
        %v1260 = vmax.f32 %v1258, %v1259
        %v1261 = vsel %vm1218, %v1205, -inf
        %v1262 = vrot.slane %v1261, 4
        %v1263 = vmax.f32 %v1261, %v1262
        %v1264 = vrot.slane %v1263, 2
        %v1265 = vmax.f32 %v1263, %v1264
        %v1266 = vrot.slane %v1265, 1
        %v1267 = vmax.f32 %v1265, %v1266
        %v1268 = vsel %vm1218, %v1213, -inf
        %v1269 = vrot.slane %v1268, 4
        %v1270 = vmax.f32 %v1268, %v1269
        %v1271 = vrot.slane %v1270, 2
        %v1272 = vmax.f32 %v1270, %v1271
        %v1273 = vrot.slane %v1272, 1
        %v1274 = vmax.f32 %v1272, %v1273
        %v1283 = vcombine.low %v1225, %v1232
        %v1284 = vcombine.low %v1239, %v1246
        %v1285 = vcombine.low %v1253, %v1260
        %v1286 = vcombine.low %v1267, %v1274
        %v1291 = vsub.f32 %v1202, %v1283
        %v1292 = vsub.f32 %v1203, %v1284
        %v1293 = vsub.f32 %v1204, %v1285
        %v1294 = vsub.f32 %v1205, %v1286
        %v1295 = vmul.f32 %v1291, 1.442695
        %v1296 = vpow.pop %v1295
        %v1297 = vmul.f32 %v1292, 1.442695
        %v1298 = vpow.pop %v1297
        %v1299 = vmul.f32 %v1293, 1.442695
        %v1300 = vpow.pop %v1299
        %v1301 = vmul.f32 %v1294, 1.442695
        %v1302 = vpow.pop %v1301
        %v1307 = vcombine.high %v1296, %v1296
        %v1308 = vcombine.high %v1298, %v1298
        %v1309 = vcombine.high %v1300, %v1300
        %v1310 = vcombine.high %v1302, %v1302
        %v1315 = vsel %vm1218, %v1296, 0.0
        %v1316 = vrot.slane %v1315, 4
        %v1317 = vadd.f32 %v1315, %v1316
        %v1318 = vrot.slane %v1317, 2
        %v1319 = vadd.f32 %v1317, %v1318
        %v1320 = vrot.slane %v1319, 1
        %v1321 = vadd.f32 %v1319, %v1320
        %v1322 = vsel %vm1218, %v1307, 0.0
        %v1323 = vrot.slane %v1322, 4
        %v1324 = vadd.f32 %v1322, %v1323
        %v1325 = vrot.slane %v1324, 2
        %v1326 = vadd.f32 %v1324, %v1325
        %v1327 = vrot.slane %v1326, 1
        %v1328 = vadd.f32 %v1326, %v1327
        %v1329 = vsel %vm1218, %v1298, 0.0
        %v1330 = vrot.slane %v1329, 4
        %v1331 = vadd.f32 %v1329, %v1330
        %v1332 = vrot.slane %v1331, 2
        %v1333 = vadd.f32 %v1331, %v1332
        %v1334 = vrot.slane %v1333, 1
        %v1335 = vadd.f32 %v1333, %v1334
        %v1336 = vsel %vm1218, %v1308, 0.0
        %v1337 = vrot.slane %v1336, 4
        %v1338 = vadd.f32 %v1336, %v1337
        %v1339 = vrot.slane %v1338, 2
        %v1340 = vadd.f32 %v1338, %v1339
        %v1341 = vrot.slane %v1340, 1
        %v1342 = vadd.f32 %v1340, %v1341
        %v1343 = vsel %vm1218, %v1300, 0.0
        %v1344 = vrot.slane %v1343, 4
        %v1345 = vadd.f32 %v1343, %v1344
        %v1346 = vrot.slane %v1345, 2
        %v1347 = vadd.f32 %v1345, %v1346
        %v1348 = vrot.slane %v1347, 1
        %v1349 = vadd.f32 %v1347, %v1348
        %v1350 = vsel %vm1218, %v1309, 0.0
        %v1351 = vrot.slane %v1350, 4
        %v1352 = vadd.f32 %v1350, %v1351
        %v1353 = vrot.slane %v1352, 2
        %v1354 = vadd.f32 %v1352, %v1353
        %v1355 = vrot.slane %v1354, 1
        %v1356 = vadd.f32 %v1354, %v1355
        %v1357 = vsel %vm1218, %v1302, 0.0
        %v1358 = vrot.slane %v1357, 4
        %v1359 = vadd.f32 %v1357, %v1358
        %v1360 = vrot.slane %v1359, 2
        %v1361 = vadd.f32 %v1359, %v1360
        %v1362 = vrot.slane %v1361, 1
        %v1363 = vadd.f32 %v1361, %v1362
        %v1364 = vsel %vm1218, %v1310, 0.0
        %v1365 = vrot.slane %v1364, 4
        %v1366 = vadd.f32 %v1364, %v1365
        %v1367 = vrot.slane %v1366, 2
        %v1368 = vadd.f32 %v1366, %v1367
        %v1369 = vrot.slane %v1368, 1
        %v1370 = vadd.f32 %v1368, %v1369
        %v1379 = vcombine.low %v1321, %v1328
        %v1380 = vcombine.low %v1335, %v1342
        %v1381 = vcombine.low %v1349, %v1356
        %v1382 = vcombine.low %v1363, %v1370
        %v1387 = vrcp.pop %v1379
        %v1388 = vmul.f32 %v1296, %v1387
        %v1389 = vrcp.pop %v1380
        %v1390 = vmul.f32 %v1298, %v1389
        %v1391 = vrcp.pop %v1381
        %v1392 = vmul.f32 %v1300, %v1391
        %v1393 = vrcp.pop %v1382
        %v1394 = vmul.f32 %v1302, %v1393
        %1395 = vst [vmem:[%s538] sm:$0x77] %v1388
        %1396 = vst [vmem:[%s538 + $0x8] sm:$0x77] %v1390
        %1397 = vst [vmem:[%s538 + $0x10] sm:$0x77] %v1392
        %1398 = vst [vmem:[%s538 + $0x18] sm:$0x77] %v1394
        %s1399 = smul.u32 8, %s20
        %p1400 = scmp.lt.s32.totalorder %s21, 2
        %s1401 = scalar_select %p1400, %s21, 2
        %p1402 = scmp.lt.s32.totalorder %s1399, 15
        %s1403 = scalar_select %p1402, %s1399, 15
        %s1404 = smul.addr %s1401, 16
        %s1405 = sadd.s32 %s1403, %s1404
        %s1406 = smul.addr %s1405, 4
        %s1407 = scalar_lea.vmem %s5, %s1406
        // Predicated region
        $region87: #{gt_attn.1} parent=77 // pred_check
          %p1408 = pneg %p182
        $region88: #{gt_attn.1} parent=77 // pred_check_branch
          %1410 = sbr.rel (%p1408) target = $region90
        $region89: #{gt_attn.1} parent=77 // pred_region
          %s1411 = smul.u32 8, %s20
        $region90: #{gt_attn.1} parent=77 // pred_fallthru
          _
      $region78: #{gt_attn.1} parent=5 // pred_fallthru
        _
      %p1412 = scmp.le.s32.totalorder 2, %s11
      // Predicated region
      $region91: #{gt_attn.1} parent=5 // pred_check
        %p1413 = pneg %p1412
      $region92: #{gt_attn.1} parent=5 // pred_check_branch
        %1415 = sbr.rel (%p1413) target = $region94
      $region93: #{gt_attn.1} parent=5 // pred_region
        %s1416 = ssub.s32 %s11, 2
        // Predicated region
        $region95: #{gt_attn.1} parent=93 // pred_check
          %p1417 = pneg %p188
        $region96: #{gt_attn.1} parent=93 // pred_check_branch
          %1419 = sbr.rel (%p1417) target = $region98
        $region97: #{gt_attn.1} parent=93 // pred_region
          %s1420 = smul.u32 8, %s22
          %p1421 = scmp.lt.s32.totalorder %s23, 2
          %s1422 = scalar_select %p1421, %s23, 2
          %p1423 = scmp.lt.s32.totalorder %s1420, 15
          %s1424 = scalar_select %p1423, %s1420, 15
          %s1425 = smul.addr %s1422, 16
          %s1426 = sadd.s32 %s1424, %s1425
          %s1427 = smul.addr %s1426, 4
          %s1428 = scalar_lea.vmem %s5, %s1427
        $region98: #{gt_attn.1} parent=93 // pred_fallthru
          _
      $region94: #{gt_attn.1} parent=5 // pred_fallthru
        _
    $region6: #{gt_attn.1} parent=1 // loop_footer
      %s15 = sadd.s32 1, %s11
    $region7: #{gt_attn.1} parent=1 // loop_footer_branch
      %10 = sbr.rel target = $region3
    $region8: #{gt_attn.1} parent=1 // loop_exit
      _

</llo_original>
